<compile_context>
chip_gen: v6e
topology: v6e:2x2x1
jax: 0.10.0
libtpu: 0.0.40
codegen_flags: <defaults>
</compile_context>

<pallas_src>
import math

import jax
import jax.numpy as jnp
from jax import lax
from jax.experimental import pallas as pl
from jax.experimental.pallas import tpu as pltpu

BN_EPS = 1e-5  # PyTorch BatchNorm2d default


def _round_up(a, b):
    return -(-a // b) * b


# --------------------------------------------------------------------------- #
# Kernel
# --------------------------------------------------------------------------- #
def emb_layers_kernel(x_ref, w_ref, b_ref, o_ref):
    """One (batch, time-tile) step of the fused EmbeddingLayers forward.

    x_ref : (1, row_tile, C)   f32 input tile (rows = time, cols = channels)
    w_ref : (L, C, C)          bf16 folded weights, laid out (in, out)
    b_ref : (L, C)             f32 folded per-layer bias
    o_ref : (1, C, row_tile)   f32 output tile (already channel-major)
    """
    x = x_ref[0]                                   # (row_tile, C) f32, stays in VMEM
    h = x.astype(jnp.bfloat16)                     # bf16 MXU input (BN0 folded into W0)

    n_layers = w_ref.shape[0]                      # static -> unrolled
    z = None
    for i in range(n_layers):
        z = jnp.dot(h, w_ref[i], preferred_element_type=jnp.float32)  # 1x1 conv (MXU)
        z = jnp.maximum(z + b_ref[i:i + 1, :], 0.0)                   # folded BN + ReLU
        h = z.astype(jnp.bfloat16)
        # F.dropout: eval-mode => identity

    out = z + x                                    # residual = raw input (pre-BN0)
    # Store transposed -> (C, row_tile): output leaves the kernel channel-major,
    # so the wrapper never round-trips the output through HBM for a transpose.
    o_ref[0] = jnp.transpose(out).astype(o_ref.dtype)


# --------------------------------------------------------------------------- #
# BN folding (trace-time, wrapper side)
# --------------------------------------------------------------------------- #
def fold_bn_into_weights(conv_weights, gamma, beta, mean, var, eps=BN_EPS):
    """conv_weights: (L, out, in). BN params: (L+1, C).

    Returns w_eff (L, in, out) and b_eff (L, out) such that the eval-mode
    forward is:  h = x;  for i: h = ReLU(h @ w_eff[i] + b_eff[i]);  out = h + x.
    """
    conv_weights = conv_weights.astype(jnp.float32)
    gamma = gamma.astype(jnp.float32)
    beta = beta.astype(jnp.float32)
    mean = mean.astype(jnp.float32)
    var = var.astype(jnp.float32)

    scale = gamma * lax.rsqrt(var + eps)           # (L+1, C)
    shift = beta - mean * scale                    # (L+1, C)

    L = conv_weights.shape[0]
    w_eff, b_eff = [], []
    for i in range(L):
        wt = conv_weights[i].T                     # (in, out)
        if i == 0:
            # BN0 on the input side, BN1 on the output side.
            w = scale[0][:, None] * wt * scale[1][None, :]
            b = (shift[0] @ wt) * scale[1] + shift[1]
        else:
            w = wt * scale[i + 1][None, :]
            b = shift[i + 1]
        w_eff.append(w)
        b_eff.append(b)
    return jnp.stack(w_eff), jnp.stack(b_eff)


# --------------------------------------------------------------------------- #
# Wrapper
# --------------------------------------------------------------------------- #
def embedding_layers_forward(x_btf, conv_weights, bn_gamma, bn_beta, bn_mean,
                             bn_var, *, row_tile=256):
    """x_btf: (batch, time_steps, freq_bins).  Returns (batch, hidden, time, 1)."""
    B, T, F = x_btf.shape
    L, H, H_in = conv_weights.shape
    assert F == H == H_in, "residual add requires freq_bins == hidden_units"
    assert L >= 1
    assert row_tile % 8 == 0

    # Fold all BNs into the conv weights / biases at trace time.
    w_eff, b_eff = fold_bn_into_weights(conv_weights, bn_gamma, bn_beta,
                                        bn_mean, bn_var)

    # Lane-dense channel axis and tile-aligned time axis (no divisibility asserts).
    C_pad = _round_up(max(H, 128), 128)
    T_pad = _round_up(T, row_tile)

    x_p = jnp.pad(x_btf.astype(jnp.float32),
                  ((0, 0), (0, T_pad - T), (0, C_pad - F)))
    w_p = jnp.pad(w_eff, ((0, 0), (0, C_pad - H), (0, C_pad - H))).astype(jnp.bfloat16)
    b_p = jnp.pad(b_eff, ((0, 0), (0, C_pad - H)))         # f32 bias

    grid = (B, T_pad // row_tile)

    def build(single_buffer_params):
        # Weights / bias are grid-invariant: request a single VMEM buffer so the
        # default double-buffering doesn't waste VMEM at production widths.
        pk = dict(pipeline_mode=pl.Buffered(1)) if single_buffer_params else {}
        return pl.pallas_call(
            emb_layers_kernel,
            out_shape=jax.ShapeDtypeStruct((B, C_pad, T_pad), jnp.float32),
            grid_spec=pltpu.PrefetchScalarGridSpec(
                num_scalar_prefetch=0,
                grid=grid,
                in_specs=[
                    pl.BlockSpec((1, row_tile, C_pad), lambda b, t: (b, t, 0)),
                    pl.BlockSpec((L, C_pad, C_pad), lambda b, t: (0, 0, 0), **pk),
                    pl.BlockSpec((L, C_pad), lambda b, t: (0, 0), **pk),
                ],
                out_specs=pl.BlockSpec((1, C_pad, row_tile), lambda b, t: (b, 0, t)),
            ),
            compiler_params=pltpu.CompilerParams(
                dimension_semantics=("parallel", "parallel"),
                vmem_limit_bytes=32 * 1024 * 1024,
            ),
        )

    try:
        out_p = build(True)(x_p, w_p, b_p)
        out_p = jax.block_until_ready(out_p)
    except Exception:
        # pipeline_mode=Buffered(1) not supported on this jax version:
        # fall back to default double-buffering (correctness unaffected).
        out_p = build(False)(x_p, w_p, b_p)

    # Kernel already wrote channel-major: just drop padding and add the W=1 axis.
    return out_p[:, :H, :T][..., None]


# --------------------------------------------------------------------------- #
# Parameter init (mirrors init_layer / init_bn; BN stats perturbed so the
# folding path is actually exercised by the correctness check)
# --------------------------------------------------------------------------- #
def make_params(key, freq_bins, hidden_units, emb_layers):
    weights = []
    for i in range(emb_layers):
        in_ch = freq_bins if i == 0 else hidden_units
        n = in_ch * 1 * 1
        scale = math.sqrt(2.0 / n) * math.sqrt(3.0)
        key, sub = jax.random.split(key)
        w = jax.random.uniform(sub, (hidden_units, in_ch),
                               minval=-scale, maxval=scale, dtype=jnp.float32)
        weights.append(w)
    weights = jnp.stack(weights)                           # (L, out, in)

    n_bn = emb_layers + 1
    c = hidden_units                                       # == freq_bins here
    k1, k2, k3, k4 = jax.random.split(key, 4)
    bn_gamma = 1.0 + 0.1 * jax.random.normal(k1, (n_bn, c), jnp.float32)
    bn_beta = 0.05 * jax.random.normal(k2, (n_bn, c), jnp.float32)
    bn_mean = 0.1 * jax.random.normal(k3, (n_bn, c), jnp.float32)
    bn_var = 1.0 + 0.1 * jax.random.uniform(k4, (n_bn, c), jnp.float32)
    return weights, bn_gamma, bn_beta, bn_mean, bn_var


# --------------------------------------------------------------------------- #
# References
# --------------------------------------------------------------------------- #
def reference_forward_f32(x_btf, conv_weights, gamma, beta, mean, var):
    """Exact eval-mode PyTorch semantics, pure f32."""
    B, T, F = x_btf.shape
    x = x_btf.reshape(B * T, F).astype(jnp.float32)

    def bn(v, j):
        return (v - mean[j]) / jnp.sqrt(var[j] + BN_EPS) * gamma[j] + beta[j]

    residual = x
    out = bn(x, 0)
    for i in range(conv_weights.shape[0]):
        out = jnp.maximum(bn(out @ conv_weights[i].T, i + 1), 0.0)
    out = out + residual
    return jnp.transpose(out.reshape(B, T, -1), (0, 2, 1))[..., None]


def reference_forward_mixed(x_btf, w_eff, b_eff):
    """Mirrors the kernel math: folded BN + bf16 matmul, f32 accumulation."""
    B, T, F = x_btf.shape
    x = x_btf.reshape(B * T, F).astype(jnp.float32)
    h = x.astype(jnp.bfloat16)
    z = None
    for i in range(w_eff.shape[0]):
        z = jnp.dot(h, w_eff[i].astype(jnp.bfloat16),
                    preferred_element_type=jnp.float32)
        z = jnp.maximum(z + b_eff[i], 0.0)
        h = z.astype(jnp.bfloat16)
    out = z + x
    return jnp.transpose(out.reshape(B, T, -1), (0, 2, 1))[..., None]


# --------------------------------------------------------------------------- #
if __name__ == "__main__":
    # forward() input: (samples, time_steps, freq_bins)
    batch, time_steps = 2, 512
    freq_bins = hidden_units = 32      # residual requires equality
    emb_layers = 2
    drop_rate = 0.5                    # eval mode -> dropout is identity

    key = jax.random.PRNGKey(0)
    key, xkey = jax.random.split(key)
    x = jax.random.normal(xkey, (batch, time_steps, freq_bins), dtype=jnp.float32)

    weights, g, b, mu, var = make_params(key, freq_bins, hidden_units, emb_layers)

    out = embedding_layers_forward(x, weights, g, b, mu, var)
    out = jax.block_until_ready(out)
    assert out.shape == (batch, hidden_units, time_steps, 1), out.shape

    # Strict check vs a reference using the same folded-BN / bf16-matmul math.
    w_eff, b_eff = fold_bn_into_weights(weights, g, b, mu, var)
    ref_mixed = reference_forward_mixed(x, w_eff, b_eff)
    err_mixed = float(jnp.max(jnp.abs(out - ref_mixed)))
    assert err_mixed < 1e-3, err_mixed

    # Looser check vs the exact f32 PyTorch-semantics reference (bf16 inputs).
    ref_f32 = reference_forward_f32(x, weights, g, b, mu, var)
    err_f32 = float(jnp.max(jnp.abs(out - ref_f32)))
    assert err_f32 < 1e-1, err_f32

    print("KERNEL_OK")
</pallas_src>

<mosaic_0001>
module attributes {stable_mosaic.version = 11 : i64} {
  func.func @emb_layers_kernel(%arg0: i32, %arg1: i32, %arg2: memref<1x256x128xf32, #tpu.memory_space<vmem>>, %arg3: memref<2x128x128xbf16, #tpu.memory_space<vmem>>, %arg4: memref<2x128xf32, #tpu.memory_space<vmem>>, %arg5: memref<1x128x256xf32, #tpu.memory_space<vmem>>) attributes {dimension_semantics = [#tpu.dimension_semantics<parallel>, #tpu.dimension_semantics<parallel>], iteration_bounds = array<i64: 2, 2>, scalar_prefetch = 0 : i64, scratch_operands = 0 : i64, tpu.core_type = #tpu.core_type<tc>, window_params = [{transform_indices = @transform_0, window_bounds = array<i64: 1, 256, 128>}, {pipeline_mode = #tpu.pipeline_mode<synchronous>, transform_indices = @transform_1, window_bounds = array<i64: 2, 128, 128>}, {pipeline_mode = #tpu.pipeline_mode<synchronous>, transform_indices = @transform_2, window_bounds = array<i64: 2, 128>}, {transform_indices = @transform_3, window_bounds = array<i64: 1, 128, 256>}]} {
    %c0 = arith.constant 0 : index
    %c0_0 = arith.constant 0 : index
    %c0_1 = arith.constant 0 : index
    %0 = vector.load %arg2[%c0, %c0_0, %c0_1] : memref<1x256x128xf32, #tpu.memory_space<vmem>>, vector<1x256x128xf32>
    %1 = vector.shape_cast %0 : vector<1x256x128xf32> to vector<256x128xf32>
    %2 = arith.truncf %1 : vector<256x128xf32> to vector<256x128xbf16>
    %c0_2 = arith.constant 0 : index
    %c0_3 = arith.constant 0 : index
    %c0_4 = arith.constant 0 : index
    %3 = vector.load %arg3[%c0_2, %c0_3, %c0_4] : memref<2x128x128xbf16, #tpu.memory_space<vmem>>, vector<1x128x128xbf16>
    %4 = vector.shape_cast %3 : vector<1x128x128xbf16> to vector<128x128xbf16>
    %cst = arith.constant dense<0.000000e+00> : vector<256x128xf32>
    %5 = tpu.matmul %2, %4, %cst {dimension_numbers = #tpu.dot_dimension_numbers<[1], [0], [0], [1], [0, 0, 1, 1], [], []>} : vector<256x128xbf16>, vector<128x128xbf16>, vector<256x128xf32> -> vector<256x128xf32>
    %c0_5 = arith.constant 0 : index
    %c0_6 = arith.constant 0 : index
    %6 = vector.load %arg4[%c0_5, %c0_6] : memref<2x128xf32, #tpu.memory_space<vmem>>, vector<1x128xf32>
    %7 = vector.broadcast %6 : vector<1x128xf32> to vector<256x128xf32>
    %8 = arith.addf %5, %7 : vector<256x128xf32>
    %cst_7 = arith.constant 0.000000e+00 : f32
    %9 = vector.broadcast %cst_7 : f32 to vector<256x128xf32>
    %10 = arith.maximumf %8, %9 : vector<256x128xf32>
    %11 = arith.truncf %10 : vector<256x128xf32> to vector<256x128xbf16>
    %c1 = arith.constant 1 : index
    %c0_8 = arith.constant 0 : index
    %c0_9 = arith.constant 0 : index
    %12 = vector.load %arg3[%c1, %c0_8, %c0_9] : memref<2x128x128xbf16, #tpu.memory_space<vmem>>, vector<1x128x128xbf16>
    %13 = vector.shape_cast %12 : vector<1x128x128xbf16> to vector<128x128xbf16>
    %cst_10 = arith.constant dense<0.000000e+00> : vector<256x128xf32>
    %14 = tpu.matmul %11, %13, %cst_10 {dimension_numbers = #tpu.dot_dimension_numbers<[1], [0], [0], [1], [0, 0, 1, 1], [], []>} : vector<256x128xbf16>, vector<128x128xbf16>, vector<256x128xf32> -> vector<256x128xf32>
    %c1_11 = arith.constant 1 : index
    %c0_12 = arith.constant 0 : index
    %15 = vector.load %arg4[%c1_11, %c0_12] : memref<2x128xf32, #tpu.memory_space<vmem>>, vector<1x128xf32>
    %16 = vector.broadcast %15 : vector<1x128xf32> to vector<256x128xf32>
    %17 = arith.addf %14, %16 : vector<256x128xf32>
    %cst_13 = arith.constant 0.000000e+00 : f32
    %18 = vector.broadcast %cst_13 : f32 to vector<256x128xf32>
    %19 = arith.maximumf %17, %18 : vector<256x128xf32>
    %20 = arith.addf %19, %1 : vector<256x128xf32>
    %21 = tpu.transpose %20, [1, 0] : vector<256x128xf32> -> vector<128x256xf32>
    %c0_14 = arith.constant 0 : index
    %c0_15 = arith.constant 0 : index
    %c0_16 = arith.constant 0 : index
    %22 = vector.load %arg5[%c0_14, %c0_15, %c0_16] : memref<1x128x256xf32, #tpu.memory_space<vmem>>, vector<1x128x256xf32>
    %23 = vector.shape_cast %22 : vector<1x128x256xf32> to vector<128x256xf32>
    %24 = vector.shape_cast %21 : vector<128x256xf32> to vector<1x128x256xf32>
    tpu.vector_store %arg5[%c0_14, %c0_15, %c0_16], %24 {strides = array<i32>} : memref<1x128x256xf32, #tpu.memory_space<vmem>>, vector<1x128x256xf32>,
    return
  }
  func.func @transform_0(%arg0: i32, %arg1: i32) -> (i32, i32, i32) {
    %c0_i32 = arith.constant 0 : i32
    %c0_i32_0 = arith.constant 0 : i32
    return %arg0, %arg1, %c0_i32 : i32, i32, i32
  }
  func.func @transform_1(%arg0: i32, %arg1: i32) -> (i32, i32, i32) {
    %c0_i32 = arith.constant 0 : i32
    %c0_i32_0 = arith.constant 0 : i32
    %c0_i32_1 = arith.constant 0 : i32
    %c0_i32_2 = arith.constant 0 : i32
    return %c0_i32, %c0_i32_0, %c0_i32_1 : i32, i32, i32
  }
  func.func @transform_2(%arg0: i32, %arg1: i32) -> (i32, i32) {
    %c0_i32 = arith.constant 0 : i32
    %c0_i32_0 = arith.constant 0 : i32
    %c0_i32_1 = arith.constant 0 : i32
    return %c0_i32, %c0_i32_0 : i32, i32
  }
  func.func @transform_3(%arg0: i32, %arg1: i32) -> (i32, i32, i32) {
    %c0_i32 = arith.constant 0 : i32
    %c0_i32_0 = arith.constant 0 : i32
    return %arg0, %c0_i32, %arg1 : i32, i32, i32
  }
}

module attributes {stable_mosaic.version = 11 : i64} {
  func.func @emb_layers_kernel(%arg0: i32, %arg1: i32, %arg2: memref<1x256x128xf32, #tpu.memory_space<vmem>>, %arg3: memref<2x128x128xbf16, #tpu.memory_space<vmem>>, %arg4: memref<2x128xf32, #tpu.memory_space<vmem>>, %arg5: memref<1x128x256xf32, #tpu.memory_space<vmem>>) attributes {dimension_semantics = [#tpu.dimension_semantics<parallel>, #tpu.dimension_semantics<parallel>], iteration_bounds = array<i64: 2, 2>, scalar_prefetch = 0 : i64, scratch_operands = 0 : i64, tpu.core_type = #tpu.core_type<tc>, window_params = [{transform_indices = @transform_0, window_bounds = array<i64: 1, 256, 128>}, {pipeline_mode = #tpu.pipeline_mode<synchronous>, transform_indices = @transform_1, window_bounds = array<i64: 2, 128, 128>}, {pipeline_mode = #tpu.pipeline_mode<synchronous>, transform_indices = @transform_2, window_bounds = array<i64: 2, 128>}, {transform_indices = @transform_3, window_bounds = array<i64: 1, 128, 256>}]} {
    %c0 = arith.constant 0 : index
    %c0_0 = arith.constant 0 : index
    %c0_1 = arith.constant 0 : index
    %0 = vector.load %arg2[%c0, %c0_0, %c0_1] : memref<1x256x128xf32, #tpu.memory_space<vmem>>, vector<1x256x128xf32>
    %1 = vector.shape_cast %0 : vector<1x256x128xf32> to vector<256x128xf32>
    %2 = arith.truncf %1 : vector<256x128xf32> to vector<256x128xbf16>
    %c0_2 = arith.constant 0 : index
    %c0_3 = arith.constant 0 : index
    %c0_4 = arith.constant 0 : index
    %3 = vector.load %arg3[%c0_2, %c0_3, %c0_4] : memref<2x128x128xbf16, #tpu.memory_space<vmem>>, vector<1x128x128xbf16>
    %4 = vector.shape_cast %3 : vector<1x128x128xbf16> to vector<128x128xbf16>
    %cst = arith.constant dense<0.000000e+00> : vector<256x128xf32>
    %5 = tpu.matmul %2, %4, %cst {dimension_numbers = #tpu.dot_dimension_numbers<[1], [0], [0], [1], [0, 0, 1, 1], [], []>} : vector<256x128xbf16>, vector<128x128xbf16>, vector<256x128xf32> -> vector<256x128xf32>
    %c0_5 = arith.constant 0 : index
    %c0_6 = arith.constant 0 : index
    %6 = vector.load %arg4[%c0_5, %c0_6] : memref<2x128xf32, #tpu.memory_space<vmem>>, vector<1x128xf32>
    %7 = vector.broadcast %6 : vector<1x128xf32> to vector<256x128xf32>
    %8 = arith.addf %5, %7 : vector<256x128xf32>
    %cst_7 = arith.constant 0.000000e+00 : f32
    %9 = vector.broadcast %cst_7 : f32 to vector<256x128xf32>
    %10 = arith.maximumf %8, %9 : vector<256x128xf32>
    %11 = arith.truncf %10 : vector<256x128xf32> to vector<256x128xbf16>
    %c1 = arith.constant 1 : index
    %c0_8 = arith.constant 0 : index
    %c0_9 = arith.constant 0 : index
    %12 = vector.load %arg3[%c1, %c0_8, %c0_9] : memref<2x128x128xbf16, #tpu.memory_space<vmem>>, vector<1x128x128xbf16>
    %13 = vector.shape_cast %12 : vector<1x128x128xbf16> to vector<128x128xbf16>
    %cst_10 = arith.constant dense<0.000000e+00> : vector<256x128xf32>
    %14 = tpu.matmul %11, %13, %cst_10 {dimension_numbers = #tpu.dot_dimension_numbers<[1], [0], [0], [1], [0, 0, 1, 1], [], []>} : vector<256x128xbf16>, vector<128x128xbf16>, vector<256x128xf32> -> vector<256x128xf32>
    %c1_11 = arith.constant 1 : index
    %c0_12 = arith.constant 0 : index
    %15 = vector.load %arg4[%c1_11, %c0_12] : memref<2x128xf32, #tpu.memory_space<vmem>>, vector<1x128xf32>
    %16 = vector.broadcast %15 : vector<1x128xf32> to vector<256x128xf32>
    %17 = arith.addf %14, %16 : vector<256x128xf32>
    %cst_13 = arith.constant 0.000000e+00 : f32
    %18 = vector.broadcast %cst_13 : f32 to vector<256x128xf32>
    %19 = arith.maximumf %17, %18 : vector<256x128xf32>
    %20 = arith.addf %19, %1 : vector<256x128xf32>
    %21 = tpu.transpose %20, [1, 0] : vector<256x128xf32> -> vector<128x256xf32>
    %c0_14 = arith.constant 0 : index
    %c0_15 = arith.constant 0 : index
    %c0_16 = arith.constant 0 : index
    %22 = vector.load %arg5[%c0_14, %c0_15, %c0_16] : memref<1x128x256xf32, #tpu.memory_space<vmem>>, vector<1x128x256xf32>
    %23 = vector.shape_cast %22 : vector<1x128x256xf32> to vector<128x256xf32>
    %24 = vector.shape_cast %21 : vector<128x256xf32> to vector<1x128x256xf32>
    tpu.vector_store %arg5[%c0_14, %c0_15, %c0_16], %24 {strides = array<i32>} : memref<1x128x256xf32, #tpu.memory_space<vmem>>, vector<1x128x256xf32>,
    return
  }
  func.func @transform_0(%arg0: i32, %arg1: i32) -> (i32, i32, i32) {
    %c0_i32 = arith.constant 0 : i32
    %c0_i32_0 = arith.constant 0 : i32
    return %arg0, %arg1, %c0_i32 : i32, i32, i32
  }
  func.func @transform_1(%arg0: i32, %arg1: i32) -> (i32, i32, i32) {
    %c0_i32 = arith.constant 0 : i32
    %c0_i32_0 = arith.constant 0 : i32
    %c0_i32_1 = arith.constant 0 : i32
    %c0_i32_2 = arith.constant 0 : i32
    return %c0_i32, %c0_i32_0, %c0_i32_1 : i32, i32, i32
  }
  func.func @transform_2(%arg0: i32, %arg1: i32) -> (i32, i32) {
    %c0_i32 = arith.constant 0 : i32
    %c0_i32_0 = arith.constant 0 : i32
    %c0_i32_1 = arith.constant 0 : i32
    return %c0_i32, %c0_i32_0 : i32, i32
  }
  func.func @transform_3(%arg0: i32, %arg1: i32) -> (i32, i32, i32) {
    %c0_i32 = arith.constant 0 : i32
    %c0_i32_0 = arith.constant 0 : i32
    return %arg0, %c0_i32, %arg1 : i32, i32, i32
  }
}

</mosaic_0001>

<llo_original>
// kernel: tpu_custom_call.1
$region0: #{tpu_custom_call.1}
  #allocation0 [shape = 'u32[]', space=smem, size = 0x4, offset = 0x4, fixed_abs, tag = 'smem constant byte address 0x4 - core index']
  #allocation1 [shape = 'u32[144,128]{1,0:T(1,128)}', space=vmem, size = 0x12000, scoped, tag = 'internal scratch']
  %s0 = inlined_call_operand.hbm [shape: f32[2,512,128], index: 0, kind: input, shape index: {}]
  %s1 = inlined_call_operand.hbm [shape: bf16[2,128,128], index: 1, kind: input, shape index: {}]
  %s2 = inlined_call_operand.vmem [shape: f32[2,128], index: 2, kind: input, shape index: {}]
  %s3 = inlined_call_operand.hbm [shape: f32[2,128,512], index: 3, kind: output, shape index: {}]
  %s4 = sld [smem:[#allocation0]]
  $region53: #{tpu_custom_call.1} parent=0
    _
  %s6 = ssub.s32 1, %s4
  %s7 = scalar_select 0, %s6, %s4
  $region1: #{tpu_custom_call.1} parent=0
    #allocation2 [shape = 'u8[262144]{0}', space=vmem, size = 0x40000, scoped, tag = 'input window, operand 0']
    #allocation3 [shape = 's32[2]{0}', space=sflag, size = 0x8, scoped, tag = 'scoped memory for tpu_custom_call.1']
    #allocation4 [shape = 's32[2]{0}', space=sflag, size = 0x8, scoped, tag = 'scoped memory for tpu_custom_call.1']
    #allocation5 [shape = 'u8[65536]{0}', space=vmem, size = 0x10000, scoped, tag = 'input window, operand 1, single buffered']
    #allocation6 [shape = 's32[1]{0}', space=sflag, size = 0x4, scoped, tag = 'scoped memory for tpu_custom_call.1']
    #allocation7 [shape = 'u8[262144]{0}', space=vmem, size = 0x40000, scoped, tag = 'output window, operand 0']
    %8 = vsyncpa [#allocation3], 0
    %s9 = scalar_lea.sflag [#allocation3], 1
    %10 = vsyncpa %s9, 0
    %11 = vsyncpa [#allocation6], 0
    %12 = vsyncpa [#allocation4], 0
    %s13 = scalar_lea.sflag [#allocation4], 1
    %14 = vsyncpa %s13, 0
    loop: start=0, step=1, limit=6
    $region2: #{tpu_custom_call.1} parent=1 // loop_pre_header
      _
    $region3: #{tpu_custom_call.1} parent=1 // loop_header
      %s16 = sphi 0, %s20
      %p17 = scmp.ge.s32.totalorder %s16, 6
      %s23 = sphi 0, %s35
      %s24 = sphi 0, %s31
      %s25 = sphi 0, %s23
      %s26 = sphi 0, %s24
      %s27 = sphi 0, %s25
      %s28 = sphi 0, %s26
      %s40 = sphi 0, %s42
      %s43 = sphi 0, %s40
      %s44 = sphi 0, %s43
      %s60 = sphi 0, %s44
      %s64 = sphi 0, %s64
      %s66 = sphi 0, %s64
      %s67 = sphi 0, %s66
      %s81 = sphi 0, %s67
      %s85 = sphi 0, %s85
      %s87 = sphi 0, %s85
      %s88 = sphi 0, %s87
      %s102 = sphi 0, %s88
      %s110 = sphi 0, %s112
      %s113 = sphi 0, %s110
      %s114 = sphi 0, %s113
      %s130 = sphi 0, %s114
    $region4: #{tpu_custom_call.1} parent=1 // loop_header_branch
      %19 = sbr.rel (%p17) target = $region8
    $region5: #{tpu_custom_call.1} parent=1 // loop_body
      %s21 = ssub.s32 %s16, 1
      %s22 = ssub.s32 %s16, 2
      %s29 = sadd.s32 1, %s24
      %p30 = scmp.ge.s32.totalorder %s29, 2
      %s31 = scalar_select %p30, 0, %s29
      %s32 = sadd.s32 1, %s23
      %s33 = scalar_select %p30, %s32, %s23
      %p34 = scmp.ge.s32.totalorder %s33, 2
      %s35 = scalar_select %p34, 0, %s33
      %s36 = ssub.s32 %s23, %s35
      %s37 = ssub.s32 %s24, %s31
      %s38 = sor.u32 %s36, %s37
      %p39 = scmp.eq.s32.totalorder %s38, 0
      %s41 = sadd.s32 %s40, 1
      %s42 = scalar_select %p39, %s40, %s41
      %p45 = pneg %p39
      %p46 = scmp.eq.s32.totalorder %s16, 3
      %p47 = por %p45, %p46
      %p48 = scmp.ne.s32.totalorder %s40, %s43
      %p49 = scmp.eq.s32.totalorder %s16, 0
      %p50 = por %p48, %p49
      %p51 = scmp.ne.s32.totalorder %s40, %s43
      %p52 = scmp.eq.s32.totalorder %s21, 3
      %p53 = por %p51, %p52
      %p54 = scmp.ne.s32.totalorder %s43, %s44
      %p55 = scmp.eq.s32.totalorder %s21, 0
      %p56 = por %p54, %p55
      %p57 = scmp.ne.s32.totalorder %s43, %s44
      %p58 = scmp.eq.s32.totalorder %s22, 3
      %p59 = por %p57, %p58
      %p61 = scmp.ne.s32.totalorder %s44, %s60
      %p62 = scmp.eq.s32.totalorder %s22, 0
      %p63 = por %p61, %p62
      %s65 = sadd.s32 %s64, 1
      %p68 = scmp.eq.s32.totalorder %s16, 3
      %p69 = scmp.ne.s32.totalorder %s64, %s66
      %p70 = scmp.eq.s32.totalorder %s16, 0
      %p71 = por %p69, %p70
      %p72 = scmp.ne.s32.totalorder %s64, %s66
      %p73 = scmp.eq.s32.totalorder %s21, 3
      %p74 = por %p72, %p73
      %p75 = scmp.ne.s32.totalorder %s66, %s67
      %p76 = scmp.eq.s32.totalorder %s21, 0
      %p77 = por %p75, %p76
      %p78 = scmp.ne.s32.totalorder %s66, %s67
      %p79 = scmp.eq.s32.totalorder %s22, 3
      %p80 = por %p78, %p79
      %p82 = scmp.ne.s32.totalorder %s67, %s81
      %p83 = scmp.eq.s32.totalorder %s22, 0
      %p84 = por %p82, %p83
      %s86 = sadd.s32 %s85, 1
      %p89 = scmp.eq.s32.totalorder %s16, 3
      %p90 = scmp.ne.s32.totalorder %s85, %s87
      %p91 = scmp.eq.s32.totalorder %s16, 0
      %p92 = por %p90, %p91
      %p93 = scmp.ne.s32.totalorder %s85, %s87
      %p94 = scmp.eq.s32.totalorder %s21, 3
      %p95 = por %p93, %p94
      %p96 = scmp.ne.s32.totalorder %s87, %s88
      %p97 = scmp.eq.s32.totalorder %s21, 0
      %p98 = por %p96, %p97
      %p99 = scmp.ne.s32.totalorder %s87, %s88
      %p100 = scmp.eq.s32.totalorder %s22, 3
      %p101 = por %p99, %p100
      %p103 = scmp.ne.s32.totalorder %s88, %s102
      %p104 = scmp.eq.s32.totalorder %s22, 0
      %p105 = por %p103, %p104
      %s106 = ssub.s32 %s23, %s35
      %s107 = ssub.s32 %s24, %s31
      %s108 = sor.u32 %s106, %s107
      %p109 = scmp.eq.s32.totalorder %s108, 0
      %s111 = sadd.s32 %s110, 1
      %s112 = scalar_select %p109, %s110, %s111
      %p115 = pneg %p109
      %p116 = scmp.eq.s32.totalorder %s16, 3
      %p117 = por %p115, %p116
      %p118 = scmp.ne.s32.totalorder %s110, %s113
      %p119 = scmp.eq.s32.totalorder %s16, 0
      %p120 = por %p118, %p119
      %p121 = scmp.ne.s32.totalorder %s110, %s113
      %p122 = scmp.eq.s32.totalorder %s21, 3
      %p123 = por %p121, %p122
      %p124 = scmp.ne.s32.totalorder %s113, %s114
      %p125 = scmp.eq.s32.totalorder %s21, 0
      %p126 = por %p124, %p125
      %p127 = scmp.ne.s32.totalorder %s113, %s114
      %p128 = scmp.eq.s32.totalorder %s22, 3
      %p129 = por %p127, %p128
      %p131 = scmp.ne.s32.totalorder %s114, %s130
      %p132 = scmp.eq.s32.totalorder %s22, 0
      %p133 = por %p131, %p132
      %p134 = scmp.le.s32.totalorder 1, %s16
      %p135 = scmp.lt.s32.totalorder %s16, 5
      %p136 = pnand %p134, %p135
      %p137 = pneg %p136
      // Predicated region
      $region9: #{tpu_custom_call.1} parent=5 // pred_check
        _
      $region10: #{tpu_custom_call.1} parent=5 // pred_check_branch
        %139 = sbr.rel (%p136) target = $region12
      $region11: #{tpu_custom_call.1} parent=5 // pred_region
        %s140 = ssub.s32 %s16, 1
        // Predicated region
        $region13: #{tpu_custom_call.1} parent=11 // pred_check
          %p141 = pneg %p77
        $region14: #{tpu_custom_call.1} parent=11 // pred_check_branch
          %143 = sbr.rel (%p141) target = $region16
        $region15: #{tpu_custom_call.1} parent=11 // pred_region
          %s145 = ssub.s32 2048, 2048
          %146 = vsyncadd [#allocation6], %s145
          %s147 = sshll.u32 [#allocation5], 4
          %s148 = int_to_ptr.vmem [resolvable:$true] %s147
          %153 = dma.hbm_to_vmem [thread:$0]  %s1, 2048, %s148, [#allocation6], 64, 64, 4
        $region16: #{tpu_custom_call.1} parent=11 // pred_fallthru
          _
        // Predicated region
        $region17: #{tpu_custom_call.1} parent=11 // pred_check
          %p154 = pneg %p98
        $region18: #{tpu_custom_call.1} parent=11 // pred_check_branch
          %156 = sbr.rel (%p154) target = $region20
        $region19: #{tpu_custom_call.1} parent=11 // pred_region
          _
        $region20: #{tpu_custom_call.1} parent=11 // pred_fallthru
          _
      $region12: #{tpu_custom_call.1} parent=5 // pred_fallthru
        _
      %p157 = scmp.lt.s32.totalorder %s16, 4
      // Predicated region
      $region21: #{tpu_custom_call.1} parent=5 // pred_check
        %p158 = pneg %p157
      $region22: #{tpu_custom_call.1} parent=5 // pred_check_branch
        %160 = sbr.rel (%p158) target = $region24
      $region23: #{tpu_custom_call.1} parent=5 // pred_region
        // Predicated region
        $region25: #{tpu_custom_call.1} parent=23 // pred_check
          %p161 = pneg %p50
        $region26: #{tpu_custom_call.1} parent=23 // pred_check_branch
          %163 = sbr.rel (%p161) target = $region28
        $region27: #{tpu_custom_call.1} parent=23 // pred_region
          %s164 = sand.u32 %s40, 1
          %s165 = scalar_lea.sflag [#allocation3], %s164
          %s166 = sand.u32 %s40, 1
          %s167 = smul.addr %s166, 256
          %s168 = scalar_lea.vmem [#allocation2], %s167
          %s169 = smul.u32 32, %s24
          %s171 = ssub.s32 4096, 4096
          %172 = vsyncadd %s165, %s171
          %s173 = smul.addr %s23, 64
          %s174 = sadd.s32 %s169, %s173
          %s175 = smul.addr %s174, 128
          %s176 = scalar_lea.hbm %s0, %s175
          %s177 = sshll.u32 %s168, 4
          %s178 = int_to_ptr.vmem [resolvable:$true] %s177
          %183 = dma.hbm_to_vmem [thread:$0]  %s176, 4096, %s178, %s165, 128, 128, 8
        $region28: #{tpu_custom_call.1} parent=23 // pred_fallthru
          _
      $region24: #{tpu_custom_call.1} parent=5 // pred_fallthru
        _
      %p184 = scmp.le.s32.totalorder 1, %s16
      %p185 = scmp.lt.s32.totalorder %s16, 5
      %p186 = pnand %p184, %p185
      %p187 = pneg %p186
      // Predicated region
      $region29: #{tpu_custom_call.1} parent=5 // pred_check
        _
      $region30: #{tpu_custom_call.1} parent=5 // pred_check_branch
        %189 = sbr.rel (%p186) target = $region32
      $region31: #{tpu_custom_call.1} parent=5 // pred_region
        %s190 = ssub.s32 %s16, 1
        %s191 = sand.u32 %s43, 1
        %s192 = scalar_lea.sflag [#allocation3], %s191
        %s193 = sand.u32 %s43, 1
        %s194 = smul.addr %s193, 256
        %s195 = scalar_lea.vmem [#allocation2], %s194
        // Predicated region
        $region33: #{tpu_custom_call.1} parent=31 // pred_check
          %p196 = pneg %p56
        $region34: #{tpu_custom_call.1} parent=31 // pred_check_branch
          %198 = sbr.rel (%p196) target = $region36
        $region35: #{tpu_custom_call.1} parent=31 // pred_region
          %199 = dma.done %s192, 4096
        $region36: #{tpu_custom_call.1} parent=31 // pred_fallthru
          _
        // Predicated region
        $region37: #{tpu_custom_call.1} parent=31 // pred_check
          %p200 = pneg %p77
        $region38: #{tpu_custom_call.1} parent=31 // pred_check_branch
          %202 = sbr.rel (%p200) target = $region40
        $region39: #{tpu_custom_call.1} parent=31 // pred_region
          %203 = dma.done [#allocation6], 2048
        $region40: #{tpu_custom_call.1} parent=31 // pred_fallthru
          _
        %s204 = sand.u32 %s43, 1
        %s205 = scalar_lea.sflag [#allocation3], %s204
        %s206 = sand.u32 %s43, 1
        %s207 = smul.addr %s206, 256
        %s208 = scalar_lea.vmem [#allocation2], %s207
        %p209 = pneg %p56
        %p210 = pneg %p53
        %p211 = pneg %p77
        %p212 = pneg %p74
        %p213 = pneg %p98
        %p214 = pneg %p95
        %p215 = pneg %p126
        %p216 = pneg %p123
        %s217 = sand.u32 %s113, 1
        %s218 = scalar_lea.sflag [#allocation4], %s217
        %s219 = sand.u32 %s113, 1
        %s220 = smul.addr %s219, 256
        %s221 = scalar_lea.vmem [#allocation7], %s220
        %s222 = smul.u32 32, %s26
        %s223 = smul.u32 2, %s26
        %v225 = vld [vmem:[%s195] sm:$0xff]
        %v226 = vld [vmem:[%s195 + $0x8] sm:$0xff]
        %v227 = vld [vmem:[%s195 + $0x10] sm:$0xff]
        %v228 = vld [vmem:[%s195 + $0x18] sm:$0xff]
        %v229 = vld [vmem:[%s195 + $0x20] sm:$0xff]
        %v230 = vld [vmem:[%s195 + $0x28] sm:$0xff]
        %v231 = vld [vmem:[%s195 + $0x30] sm:$0xff]
        %v232 = vld [vmem:[%s195 + $0x38] sm:$0xff]
        %v233 = vld [vmem:[%s195 + $0x40] sm:$0xff]
        %v234 = vld [vmem:[%s195 + $0x48] sm:$0xff]
        %v235 = vld [vmem:[%s195 + $0x50] sm:$0xff]
        %v236 = vld [vmem:[%s195 + $0x58] sm:$0xff]
        %v237 = vld [vmem:[%s195 + $0x60] sm:$0xff]
        %v238 = vld [vmem:[%s195 + $0x68] sm:$0xff]
        %v239 = vld [vmem:[%s195 + $0x70] sm:$0xff]
        %v240 = vld [vmem:[%s195 + $0x78] sm:$0xff]
        %v241 = vld [vmem:[%s195 + $0x80] sm:$0xff]
        %v242 = vld [vmem:[%s195 + $0x88] sm:$0xff]
        %v243 = vld [vmem:[%s195 + $0x90] sm:$0xff]
        %v244 = vld [vmem:[%s195 + $0x98] sm:$0xff]
        %v245 = vld [vmem:[%s195 + $0xa0] sm:$0xff]
        %v246 = vld [vmem:[%s195 + $0xa8] sm:$0xff]
        %v247 = vld [vmem:[%s195 + $0xb0] sm:$0xff]
        %v248 = vld [vmem:[%s195 + $0xb8] sm:$0xff]
        %v249 = vld [vmem:[%s195 + $0xc0] sm:$0xff]
        %v250 = vld [vmem:[%s195 + $0xc8] sm:$0xff]
        %v251 = vld [vmem:[%s195 + $0xd0] sm:$0xff]
        %v252 = vld [vmem:[%s195 + $0xd8] sm:$0xff]
        %v253 = vld [vmem:[%s195 + $0xe0] sm:$0xff]
        %v254 = vld [vmem:[%s195 + $0xe8] sm:$0xff]
        %v255 = vld [vmem:[%s195 + $0xf0] sm:$0xff]
        %v256 = vld [vmem:[%s195 + $0xf8] sm:$0xff]
        %v257 = vpack.c.bf16 %v226, %v225
        %v258 = vpack.c.bf16 %v228, %v227
        %v259 = vpack.c.bf16 %v230, %v229
        %v260 = vpack.c.bf16 %v232, %v231
        %v261 = vpack.c.bf16 %v234, %v233
        %v262 = vpack.c.bf16 %v236, %v235
        %v263 = vpack.c.bf16 %v238, %v237
        %v264 = vpack.c.bf16 %v240, %v239
        %v265 = vpack.c.bf16 %v242, %v241
        %v266 = vpack.c.bf16 %v244, %v243
        %v267 = vpack.c.bf16 %v246, %v245
        %v268 = vpack.c.bf16 %v248, %v247
        %v269 = vpack.c.bf16 %v250, %v249
        %v270 = vpack.c.bf16 %v252, %v251
        %v271 = vpack.c.bf16 %v254, %v253
        %v272 = vpack.c.bf16 %v256, %v255
        %v273 = vld [vmem:[#allocation5] sm:$0xf]
        %v274 = vld [vmem:[#allocation5 + $0x4] sm:$0xf]
        %v275 = vld [vmem:[#allocation5 + $0x8] sm:$0xf]
        %v276 = vld [vmem:[#allocation5 + $0xc] sm:$0xf]
        %v277 = vld [vmem:[#allocation5 + $0x10] sm:$0xf]
        %v278 = vld [vmem:[#allocation5 + $0x14] sm:$0xf]
        %v279 = vld [vmem:[#allocation5 + $0x18] sm:$0xf]
        %v280 = vld [vmem:[#allocation5 + $0x1c] sm:$0xf]
        %v281 = vld [vmem:[#allocation5 + $0x20] sm:$0xf]
        %v282 = vld [vmem:[#allocation5 + $0x24] sm:$0xf]
        %v283 = vld [vmem:[#allocation5 + $0x28] sm:$0xf]
        %v284 = vld [vmem:[#allocation5 + $0x2c] sm:$0xf]
        %v285 = vld [vmem:[#allocation5 + $0x30] sm:$0xf]
        %v286 = vld [vmem:[#allocation5 + $0x34] sm:$0xf]
        %v287 = vld [vmem:[#allocation5 + $0x38] sm:$0xf]
        %v288 = vld [vmem:[#allocation5 + $0x3c] sm:$0xf]
        %v289 = vld [vmem:[%s2] sm:$0x1]
        %v290 = vlaneseq
        %v291 = vshrl.u32 %v290, 7
        %v292 = vsub.s32 0, %v291
        %v293 = vrot.slane %v289, %v292
        %v310 = vunpack.c.l.b16 %v273
        %v311 = vunpack.c.l.b16 %v274
        %v312 = vunpack.c.l.b16 %v275
        %v313 = vunpack.c.l.b16 %v276
        %v314 = vunpack.c.l.b16 %v277
        %v315 = vunpack.c.l.b16 %v278
        %v316 = vunpack.c.l.b16 %v279
        %v317 = vunpack.c.l.b16 %v280
        %v318 = vunpack.c.l.b16 %v281
        %v319 = vunpack.c.l.b16 %v282
        %v320 = vunpack.c.l.b16 %v283
        %v321 = vunpack.c.l.b16 %v284
        %v322 = vunpack.c.l.b16 %v285
        %v323 = vunpack.c.l.b16 %v286
        %v324 = vunpack.c.l.b16 %v287
        %v325 = vunpack.c.l.b16 %v288
        %v326 = vpack.c.b16 %v311, %v310
        %v327 = vpack.c.b16 %v313, %v312
        %v328 = vpack.c.b16 %v315, %v314
        %v329 = vpack.c.b16 %v317, %v316
        %v330 = vpack.c.b16 %v319, %v318
        %v331 = vpack.c.b16 %v321, %v320
        %v332 = vpack.c.b16 %v323, %v322
        %v333 = vpack.c.b16 %v325, %v324
        %342 = vmatprep.subr.bf16.mxu0 0
        %343 = vmatpush1.bf16.msra.mxu0 %v333
        %344 = vmatprep.subr.bf16.mxu0 0
        %345 = vmatpush1.bf16.msra.mxu0 %v332
        %346 = vmatprep.subr.bf16.mxu0 0
        %347 = vmatpush1.bf16.msra.mxu0 %v331
        %348 = vmatprep.subr.bf16.mxu0 0
        %349 = vmatpush1.bf16.msra.mxu0 %v330
        %350 = vmatprep.subr.bf16.mxu0 0
        %351 = vmatpush1.bf16.msra.mxu0 %v329
        %352 = vmatprep.subr.bf16.mxu0 0
        %353 = vmatpush1.bf16.msra.mxu0 %v328
        %354 = vmatprep.subr.bf16.mxu0 0
        %355 = vmatpush1.bf16.msra.mxu0 %v327
        %356 = vmatprep.subr.bf16.mxu0 0
        %357 = vmatpush1.bf16.msra.mxu0 %v326
        %358 = vmatprep.subr.bf16.mxu0 0
        %359 = vmatpush2.bf16.msra.mxu0 0
        %360 = vmatprep.subr.bf16.mxu0 0
        %361 = vmatpush2.bf16.msra.mxu0 0
        %362 = vmatprep.subr.bf16.mxu0 0
        %363 = vmatpush2.bf16.msra.mxu0 0
        %364 = vmatprep.subr.bf16.mxu0 0
        %365 = vmatpush2.bf16.msra.mxu0 0
        %366 = vmatprep.subr.bf16.mxu0 0
        %367 = vmatpush2.bf16.msra.mxu0 0
        %368 = vmatprep.subr.bf16.mxu0 0
        %369 = vmatpush2.bf16.msra.mxu0 0
        %370 = vmatprep.subr.bf16.mxu0 0
        %371 = vmatpush2.bf16.msra.mxu0 0
        %372 = vmatprep.subr.bf16.mxu0 0
        %373 = vmatpush2.bf16.msra.mxu0 0
        %374 = vmatprep.mubr.bf16.mxu0 0
        %375 = vmatmul.mubr.bf16.gmra.mxu0 %v257
        %v376 = vpop.f32.mrf.mxu0
        %v377 = vadd.f32 %v293, %v376
        %v378 = vpop.f32.mrf.mxu0
        %v379 = vpop.f32.mrf.mxu0
        %v380 = vadd.f32 %v293, %v379
        %v381 = vpop.f32.mrf.mxu0
        %382 = vmatprep.mubr.bf16.mxu0 0
        %383 = vmatmul.mubr.bf16.gmra.mxu0 %v258
        %v384 = vpop.f32.mrf.mxu0
        %v385 = vadd.f32 %v293, %v384
        %v386 = vpop.f32.mrf.mxu0
        %v387 = vpop.f32.mrf.mxu0
        %v388 = vadd.f32 %v293, %v387
        %v389 = vpop.f32.mrf.mxu0
        %390 = vmatprep.mubr.bf16.mxu0 0
        %391 = vmatmul.mubr.bf16.gmra.mxu0 %v259
        %v392 = vpop.f32.mrf.mxu0
        %v393 = vadd.f32 %v293, %v392
        %v394 = vpop.f32.mrf.mxu0
        %v395 = vpop.f32.mrf.mxu0
        %v396 = vadd.f32 %v293, %v395
        %v397 = vpop.f32.mrf.mxu0
        %398 = vmatprep.mubr.bf16.mxu0 0
        %399 = vmatmul.mubr.bf16.gmra.mxu0 %v260
        %v400 = vpop.f32.mrf.mxu0
        %v401 = vadd.f32 %v293, %v400
        %v402 = vpop.f32.mrf.mxu0
        %v403 = vpop.f32.mrf.mxu0
        %v404 = vadd.f32 %v293, %v403
        %v405 = vpop.f32.mrf.mxu0
        %406 = vmatprep.mubr.bf16.mxu0 0
        %407 = vmatmul.mubr.bf16.gmra.mxu0 %v261
        %v408 = vpop.f32.mrf.mxu0
        %v409 = vadd.f32 %v293, %v408
        %v410 = vpop.f32.mrf.mxu0
        %v411 = vpop.f32.mrf.mxu0
        %v412 = vadd.f32 %v293, %v411
        %v413 = vpop.f32.mrf.mxu0
        %414 = vmatprep.mubr.bf16.mxu0 0
        %415 = vmatmul.mubr.bf16.gmra.mxu0 %v262
        %v416 = vpop.f32.mrf.mxu0
        %v417 = vadd.f32 %v293, %v416
        %v418 = vpop.f32.mrf.mxu0
        %v419 = vpop.f32.mrf.mxu0
        %v420 = vadd.f32 %v293, %v419
        %v421 = vpop.f32.mrf.mxu0
        %422 = vmatprep.mubr.bf16.mxu0 0
        %423 = vmatmul.mubr.bf16.gmra.mxu0 %v263
        %v424 = vpop.f32.mrf.mxu0
        %v425 = vadd.f32 %v293, %v424
        %v426 = vpop.f32.mrf.mxu0
        %v427 = vpop.f32.mrf.mxu0
        %v428 = vadd.f32 %v293, %v427
        %v429 = vpop.f32.mrf.mxu0
        %430 = vmatprep.mubr.bf16.mxu0 0
        %431 = vmatmul.mubr.bf16.gmra.mxu0 %v264
        %v432 = vpop.f32.mrf.mxu0
        %v433 = vadd.f32 %v293, %v432
        %v434 = vpop.f32.mrf.mxu0
        %v435 = vpop.f32.mrf.mxu0
        %v436 = vadd.f32 %v293, %v435
        %v437 = vpop.f32.mrf.mxu0
        %438 = vmatprep.mubr.bf16.mxu0 0
        %439 = vmatmul.mubr.bf16.gmra.mxu0 %v265
        %v440 = vpop.f32.mrf.mxu0
        %v441 = vadd.f32 %v293, %v440
        %v442 = vpop.f32.mrf.mxu0
        %v443 = vpop.f32.mrf.mxu0
        %v444 = vadd.f32 %v293, %v443
        %v445 = vpop.f32.mrf.mxu0
        %446 = vmatprep.mubr.bf16.mxu0 0
        %447 = vmatmul.mubr.bf16.gmra.mxu0 %v266
        %v448 = vpop.f32.mrf.mxu0
        %v449 = vadd.f32 %v293, %v448
        %v450 = vpop.f32.mrf.mxu0
        %v451 = vpop.f32.mrf.mxu0
        %v452 = vadd.f32 %v293, %v451
        %v453 = vpop.f32.mrf.mxu0
        %454 = vmatprep.mubr.bf16.mxu0 0
        %455 = vmatmul.mubr.bf16.gmra.mxu0 %v267
        %v456 = vpop.f32.mrf.mxu0
        %v457 = vadd.f32 %v293, %v456
        %v458 = vpop.f32.mrf.mxu0
        %v459 = vpop.f32.mrf.mxu0
        %v460 = vadd.f32 %v293, %v459
        %v461 = vpop.f32.mrf.mxu0
        %462 = vmatprep.mubr.bf16.mxu0 0
        %463 = vmatmul.mubr.bf16.gmra.mxu0 %v268
        %v464 = vpop.f32.mrf.mxu0
        %v465 = vadd.f32 %v293, %v464
        %v466 = vpop.f32.mrf.mxu0
        %v467 = vpop.f32.mrf.mxu0
        %v468 = vadd.f32 %v293, %v467
        %v469 = vpop.f32.mrf.mxu0
        %470 = vmatprep.mubr.bf16.mxu0 0
        %471 = vmatmul.mubr.bf16.gmra.mxu0 %v269
        %v472 = vpop.f32.mrf.mxu0
        %v473 = vadd.f32 %v293, %v472
        %v474 = vpop.f32.mrf.mxu0
        %v475 = vpop.f32.mrf.mxu0
        %v476 = vadd.f32 %v293, %v475
        %v477 = vpop.f32.mrf.mxu0
        %478 = vmatprep.mubr.bf16.mxu0 0
        %479 = vmatmul.mubr.bf16.gmra.mxu0 %v270
        %v480 = vpop.f32.mrf.mxu0
        %v481 = vadd.f32 %v293, %v480
        %v482 = vpop.f32.mrf.mxu0
        %v483 = vpop.f32.mrf.mxu0
        %v484 = vadd.f32 %v293, %v483
        %v485 = vpop.f32.mrf.mxu0
        %486 = vmatprep.mubr.bf16.mxu0 0
        %487 = vmatmul.mubr.bf16.gmra.mxu0 %v271
        %v488 = vpop.f32.mrf.mxu0
        %v489 = vadd.f32 %v293, %v488
        %v490 = vpop.f32.mrf.mxu0
        %v491 = vpop.f32.mrf.mxu0
        %v492 = vadd.f32 %v293, %v491
        %v493 = vpop.f32.mrf.mxu0
        %494 = vmatprep.mubr.bf16.mxu0 0
        %495 = vmatmul.mubr.bf16.gmra.mxu0 %v272
        %v496 = vpop.f32.mrf.mxu0
        %v497 = vadd.f32 %v293, %v496
        %v498 = vpop.f32.mrf.mxu0
        %v499 = vpop.f32.mrf.mxu0
        %v500 = vadd.f32 %v293, %v499
        %v501 = vpop.f32.mrf.mxu0
        %502 = vdwg.mxu0
        %v503 = vmax.f32 %v377, 0.0
        %v504 = vmax.f32 %v380, 0.0
        %v505 = vmax.f32 %v385, 0.0
        %v506 = vmax.f32 %v388, 0.0
        %v507 = vmax.f32 %v393, 0.0
        %v508 = vmax.f32 %v396, 0.0
        %v509 = vmax.f32 %v401, 0.0
        %v510 = vmax.f32 %v404, 0.0
        %v511 = vmax.f32 %v409, 0.0
        %v512 = vmax.f32 %v412, 0.0
        %v513 = vmax.f32 %v417, 0.0
        %v514 = vmax.f32 %v420, 0.0
        %v515 = vmax.f32 %v425, 0.0
        %v516 = vmax.f32 %v428, 0.0
        %v517 = vmax.f32 %v433, 0.0
        %v518 = vmax.f32 %v436, 0.0
        %v519 = vmax.f32 %v441, 0.0
        %v520 = vmax.f32 %v444, 0.0
        %v521 = vmax.f32 %v449, 0.0
        %v522 = vmax.f32 %v452, 0.0
        %v523 = vmax.f32 %v457, 0.0
        %v524 = vmax.f32 %v460, 0.0
        %v525 = vmax.f32 %v465, 0.0
        %v526 = vmax.f32 %v468, 0.0
        %v527 = vmax.f32 %v473, 0.0
        %v528 = vmax.f32 %v476, 0.0
        %v529 = vmax.f32 %v481, 0.0
        %v530 = vmax.f32 %v484, 0.0
        %v531 = vmax.f32 %v489, 0.0
        %v532 = vmax.f32 %v492, 0.0
        %v533 = vmax.f32 %v497, 0.0
        %v534 = vmax.f32 %v500, 0.0
        %v535 = vpack.c.bf16 %v504, %v503
        %v536 = vpack.c.bf16 %v506, %v505
        %v537 = vpack.c.bf16 %v508, %v507
        %v538 = vpack.c.bf16 %v510, %v509
        %v539 = vpack.c.bf16 %v512, %v511
        %v540 = vpack.c.bf16 %v514, %v513
        %v541 = vpack.c.bf16 %v516, %v515
        %v542 = vpack.c.bf16 %v518, %v517
        %v543 = vpack.c.bf16 %v520, %v519
        %v544 = vpack.c.bf16 %v522, %v521
        %v545 = vpack.c.bf16 %v524, %v523
        %v546 = vpack.c.bf16 %v526, %v525
        %v547 = vpack.c.bf16 %v528, %v527
        %v548 = vpack.c.bf16 %v530, %v529
        %v549 = vpack.c.bf16 %v532, %v531
        %v550 = vpack.c.bf16 %v534, %v533
        %s551 = scalar_lea.vmem [#allocation5], 64
        %v552 = vld [vmem:[%s551] sm:$0xf]
        %v553 = vld [vmem:[%s551 + $0x4] sm:$0xf]
        %v554 = vld [vmem:[%s551 + $0x8] sm:$0xf]
        %v555 = vld [vmem:[%s551 + $0xc] sm:$0xf]
        %v556 = vld [vmem:[%s551 + $0x10] sm:$0xf]
        %v557 = vld [vmem:[%s551 + $0x14] sm:$0xf]
        %v558 = vld [vmem:[%s551 + $0x18] sm:$0xf]
        %v559 = vld [vmem:[%s551 + $0x1c] sm:$0xf]
        %v560 = vld [vmem:[%s551 + $0x20] sm:$0xf]
        %v561 = vld [vmem:[%s551 + $0x24] sm:$0xf]
        %v562 = vld [vmem:[%s551 + $0x28] sm:$0xf]
        %v563 = vld [vmem:[%s551 + $0x2c] sm:$0xf]
        %v564 = vld [vmem:[%s551 + $0x30] sm:$0xf]
        %v565 = vld [vmem:[%s551 + $0x34] sm:$0xf]
        %v566 = vld [vmem:[%s551 + $0x38] sm:$0xf]
        %v567 = vld [vmem:[%s551 + $0x3c] sm:$0xf]
        %v568 = vld [vmem:[%s2 + $0x1] sm:$0x1]
        %v569 = vlaneseq
        %v570 = vshrl.u32 %v569, 7
        %v571 = vsub.s32 0, %v570
        %v572 = vrot.slane %v568, %v571
        %v589 = vunpack.c.l.b16 %v552
        %v590 = vunpack.c.l.b16 %v553
        %v591 = vunpack.c.l.b16 %v554
        %v592 = vunpack.c.l.b16 %v555
        %v593 = vunpack.c.l.b16 %v556
        %v594 = vunpack.c.l.b16 %v557
        %v595 = vunpack.c.l.b16 %v558
        %v596 = vunpack.c.l.b16 %v559
        %v597 = vunpack.c.l.b16 %v560
        %v598 = vunpack.c.l.b16 %v561
        %v599 = vunpack.c.l.b16 %v562
        %v600 = vunpack.c.l.b16 %v563
        %v601 = vunpack.c.l.b16 %v564
        %v602 = vunpack.c.l.b16 %v565
        %v603 = vunpack.c.l.b16 %v566
        %v604 = vunpack.c.l.b16 %v567
        %v605 = vpack.c.b16 %v590, %v589
        %v606 = vpack.c.b16 %v592, %v591
        %v607 = vpack.c.b16 %v594, %v593
        %v608 = vpack.c.b16 %v596, %v595
        %v609 = vpack.c.b16 %v598, %v597
        %v610 = vpack.c.b16 %v600, %v599
        %v611 = vpack.c.b16 %v602, %v601
        %v612 = vpack.c.b16 %v604, %v603
        %621 = vmatprep.subr.bf16.mxu0 0
        %622 = vmatpush1.bf16.msra.mxu0 %v612
        %623 = vmatprep.subr.bf16.mxu0 0
        %624 = vmatpush1.bf16.msra.mxu0 %v611
        %625 = vmatprep.subr.bf16.mxu0 0
        %626 = vmatpush1.bf16.msra.mxu0 %v610
        %627 = vmatprep.subr.bf16.mxu0 0
        %628 = vmatpush1.bf16.msra.mxu0 %v609
        %629 = vmatprep.subr.bf16.mxu0 0
        %630 = vmatpush1.bf16.msra.mxu0 %v608
        %631 = vmatprep.subr.bf16.mxu0 0
        %632 = vmatpush1.bf16.msra.mxu0 %v607
        %633 = vmatprep.subr.bf16.mxu0 0
        %634 = vmatpush1.bf16.msra.mxu0 %v606
        %635 = vmatprep.subr.bf16.mxu0 0
        %636 = vmatpush1.bf16.msra.mxu0 %v605
        %637 = vmatprep.subr.bf16.mxu0 0
        %638 = vmatpush2.bf16.msra.mxu0 0
        %639 = vmatprep.subr.bf16.mxu0 0
        %640 = vmatpush2.bf16.msra.mxu0 0
        %641 = vmatprep.subr.bf16.mxu0 0
        %642 = vmatpush2.bf16.msra.mxu0 0
        %643 = vmatprep.subr.bf16.mxu0 0
        %644 = vmatpush2.bf16.msra.mxu0 0
        %645 = vmatprep.subr.bf16.mxu0 0
        %646 = vmatpush2.bf16.msra.mxu0 0
        %647 = vmatprep.subr.bf16.mxu0 0
        %648 = vmatpush2.bf16.msra.mxu0 0
        %649 = vmatprep.subr.bf16.mxu0 0
        %650 = vmatpush2.bf16.msra.mxu0 0
        %651 = vmatprep.subr.bf16.mxu0 0
        %652 = vmatpush2.bf16.msra.mxu0 0
        %653 = vmatprep.mubr.bf16.mxu0 0
        %654 = vmatmul.mubr.bf16.gmra.mxu0 %v535
        %v655 = vpop.f32.mrf.mxu0
        %v656 = vadd.f32 %v572, %v655
        %v657 = vpop.f32.mrf.mxu0
        %v658 = vpop.f32.mrf.mxu0
        %v659 = vadd.f32 %v572, %v658
        %v660 = vpop.f32.mrf.mxu0
        %661 = vmatprep.mubr.bf16.mxu0 0
        %662 = vmatmul.mubr.bf16.gmra.mxu0 %v536
        %v663 = vpop.f32.mrf.mxu0
        %v664 = vadd.f32 %v572, %v663
        %v665 = vpop.f32.mrf.mxu0
        %v666 = vpop.f32.mrf.mxu0
        %v667 = vadd.f32 %v572, %v666
        %v668 = vpop.f32.mrf.mxu0
        %669 = vmatprep.mubr.bf16.mxu0 0
        %670 = vmatmul.mubr.bf16.gmra.mxu0 %v537
        %v671 = vpop.f32.mrf.mxu0
        %v672 = vadd.f32 %v572, %v671
        %v673 = vpop.f32.mrf.mxu0
        %v674 = vpop.f32.mrf.mxu0
        %v675 = vadd.f32 %v572, %v674
        %v676 = vpop.f32.mrf.mxu0
        %677 = vmatprep.mubr.bf16.mxu0 0
        %678 = vmatmul.mubr.bf16.gmra.mxu0 %v538
        %v679 = vpop.f32.mrf.mxu0
        %v680 = vadd.f32 %v572, %v679
        %v681 = vpop.f32.mrf.mxu0
        %v682 = vpop.f32.mrf.mxu0
        %v683 = vadd.f32 %v572, %v682
        %v684 = vpop.f32.mrf.mxu0
        %685 = vmatprep.mubr.bf16.mxu0 0
        %686 = vmatmul.mubr.bf16.gmra.mxu0 %v539
        %v687 = vpop.f32.mrf.mxu0
        %v688 = vadd.f32 %v572, %v687
        %v689 = vpop.f32.mrf.mxu0
        %v690 = vpop.f32.mrf.mxu0
        %v691 = vadd.f32 %v572, %v690
        %v692 = vpop.f32.mrf.mxu0
        %693 = vmatprep.mubr.bf16.mxu0 0
        %694 = vmatmul.mubr.bf16.gmra.mxu0 %v540
        %v695 = vpop.f32.mrf.mxu0
        %v696 = vadd.f32 %v572, %v695
        %v697 = vpop.f32.mrf.mxu0
        %v698 = vpop.f32.mrf.mxu0
        %v699 = vadd.f32 %v572, %v698
        %v700 = vpop.f32.mrf.mxu0
        %701 = vmatprep.mubr.bf16.mxu0 0
        %702 = vmatmul.mubr.bf16.gmra.mxu0 %v541
        %v703 = vpop.f32.mrf.mxu0
        %v704 = vadd.f32 %v572, %v703
        %v705 = vpop.f32.mrf.mxu0
        %v706 = vpop.f32.mrf.mxu0
        %v707 = vadd.f32 %v572, %v706
        %v708 = vpop.f32.mrf.mxu0
        %709 = vmatprep.mubr.bf16.mxu0 0
        %710 = vmatmul.mubr.bf16.gmra.mxu0 %v542
        %v711 = vpop.f32.mrf.mxu0
        %v712 = vadd.f32 %v572, %v711
        %v713 = vpop.f32.mrf.mxu0
        %v714 = vpop.f32.mrf.mxu0
        %v715 = vadd.f32 %v572, %v714
        %v716 = vpop.f32.mrf.mxu0
        %717 = vmatprep.mubr.bf16.mxu0 0
        %718 = vmatmul.mubr.bf16.gmra.mxu0 %v543
        %v719 = vpop.f32.mrf.mxu0
        %v720 = vadd.f32 %v572, %v719
        %v721 = vpop.f32.mrf.mxu0
        %v722 = vpop.f32.mrf.mxu0
        %v723 = vadd.f32 %v572, %v722
        %v724 = vpop.f32.mrf.mxu0
        %725 = vmatprep.mubr.bf16.mxu0 0
        %726 = vmatmul.mubr.bf16.gmra.mxu0 %v544
        %v727 = vpop.f32.mrf.mxu0
        %v728 = vadd.f32 %v572, %v727
        %v729 = vpop.f32.mrf.mxu0
        %v730 = vpop.f32.mrf.mxu0
        %v731 = vadd.f32 %v572, %v730
        %v732 = vpop.f32.mrf.mxu0
        %733 = vmatprep.mubr.bf16.mxu0 0
        %734 = vmatmul.mubr.bf16.gmra.mxu0 %v545
        %v735 = vpop.f32.mrf.mxu0
        %v736 = vadd.f32 %v572, %v735
        %v737 = vpop.f32.mrf.mxu0
        %v738 = vpop.f32.mrf.mxu0
        %v739 = vadd.f32 %v572, %v738
        %v740 = vpop.f32.mrf.mxu0
        %741 = vmatprep.mubr.bf16.mxu0 0
        %742 = vmatmul.mubr.bf16.gmra.mxu0 %v546
        %v743 = vpop.f32.mrf.mxu0
        %v744 = vadd.f32 %v572, %v743
        %v745 = vpop.f32.mrf.mxu0
        %v746 = vpop.f32.mrf.mxu0
        %v747 = vadd.f32 %v572, %v746
        %v748 = vpop.f32.mrf.mxu0
        %749 = vmatprep.mubr.bf16.mxu0 0
        %750 = vmatmul.mubr.bf16.gmra.mxu0 %v547
        %v751 = vpop.f32.mrf.mxu0
        %v752 = vadd.f32 %v572, %v751
        %v753 = vpop.f32.mrf.mxu0
        %v754 = vpop.f32.mrf.mxu0
        %v755 = vadd.f32 %v572, %v754
        %v756 = vpop.f32.mrf.mxu0
        %757 = vmatprep.mubr.bf16.mxu0 0
        %758 = vmatmul.mubr.bf16.gmra.mxu0 %v548
        %v759 = vpop.f32.mrf.mxu0
        %v760 = vadd.f32 %v572, %v759
        %v761 = vpop.f32.mrf.mxu0
        %v762 = vpop.f32.mrf.mxu0
        %v763 = vadd.f32 %v572, %v762
        %v764 = vpop.f32.mrf.mxu0
        %765 = vmatprep.mubr.bf16.mxu0 0
        %766 = vmatmul.mubr.bf16.gmra.mxu0 %v549
        %v767 = vpop.f32.mrf.mxu0
        %v768 = vadd.f32 %v572, %v767
        %v769 = vpop.f32.mrf.mxu0
        %v770 = vpop.f32.mrf.mxu0
        %v771 = vadd.f32 %v572, %v770
        %v772 = vpop.f32.mrf.mxu0
        %773 = vmatprep.mubr.bf16.mxu0 0
        %774 = vmatmul.mubr.bf16.gmra.mxu0 %v550
        %v775 = vpop.f32.mrf.mxu0
        %v776 = vadd.f32 %v572, %v775
        %v777 = vpop.f32.mrf.mxu0
        %v778 = vpop.f32.mrf.mxu0
        %v779 = vadd.f32 %v572, %v778
        %v780 = vpop.f32.mrf.mxu0
        %781 = vdwg.mxu0
        %v782 = vmax.f32 %v656, 0.0
        %v783 = vmax.f32 %v659, 0.0
        %v784 = vmax.f32 %v664, 0.0
        %v785 = vmax.f32 %v667, 0.0
        %v786 = vmax.f32 %v672, 0.0
        %v787 = vmax.f32 %v675, 0.0
        %v788 = vmax.f32 %v680, 0.0
        %v789 = vmax.f32 %v683, 0.0
        %v790 = vmax.f32 %v688, 0.0
        %v791 = vmax.f32 %v691, 0.0
        %v792 = vmax.f32 %v696, 0.0
        %v793 = vmax.f32 %v699, 0.0
        %v794 = vmax.f32 %v704, 0.0
        %v795 = vmax.f32 %v707, 0.0
        %v796 = vmax.f32 %v712, 0.0
        %v797 = vmax.f32 %v715, 0.0
        %v798 = vmax.f32 %v720, 0.0
        %v799 = vmax.f32 %v723, 0.0
        %v800 = vmax.f32 %v728, 0.0
        %v801 = vmax.f32 %v731, 0.0
        %v802 = vmax.f32 %v736, 0.0
        %v803 = vmax.f32 %v739, 0.0
        %v804 = vmax.f32 %v744, 0.0
        %v805 = vmax.f32 %v747, 0.0
        %v806 = vmax.f32 %v752, 0.0
        %v807 = vmax.f32 %v755, 0.0
        %v808 = vmax.f32 %v760, 0.0
        %v809 = vmax.f32 %v763, 0.0
        %v810 = vmax.f32 %v768, 0.0
        %v811 = vmax.f32 %v771, 0.0
        %v812 = vmax.f32 %v776, 0.0
        %v813 = vmax.f32 %v779, 0.0
        %v814 = vadd.f32 %v782, %v225
        %v815 = vadd.f32 %v783, %v226
        %v816 = vadd.f32 %v784, %v227
        %v817 = vadd.f32 %v785, %v228
        %v818 = vadd.f32 %v786, %v229
        %v819 = vadd.f32 %v787, %v230
        %v820 = vadd.f32 %v788, %v231
        %v821 = vadd.f32 %v789, %v232
        %v822 = vadd.f32 %v790, %v233
        %v823 = vadd.f32 %v791, %v234
        %v824 = vadd.f32 %v792, %v235
        %v825 = vadd.f32 %v793, %v236
        %v826 = vadd.f32 %v794, %v237
        %v827 = vadd.f32 %v795, %v238
        %v828 = vadd.f32 %v796, %v239
        %v829 = vadd.f32 %v797, %v240
        %v830 = vadd.f32 %v798, %v241
        %v831 = vadd.f32 %v799, %v242
        %v832 = vadd.f32 %v800, %v243
        %v833 = vadd.f32 %v801, %v244
        %v834 = vadd.f32 %v802, %v245
        %v835 = vadd.f32 %v803, %v246
        %v836 = vadd.f32 %v804, %v247
        %v837 = vadd.f32 %v805, %v248
        %v838 = vadd.f32 %v806, %v249
        %v839 = vadd.f32 %v807, %v250
        %v840 = vadd.f32 %v808, %v251
        %v841 = vadd.f32 %v809, %v252
        %v842 = vadd.f32 %v810, %v253
        %v843 = vadd.f32 %v811, %v254
        %v844 = vadd.f32 %v812, %v255
        %v845 = vadd.f32 %v813, %v256
        %846 = vxpose.xlu0.b32.start [1/16] %v814, 128
        %847 = vxpose.xlu0.b32.cont [2/16] %v815, 128
        %848 = vxpose.xlu0.b32.cont [3/16] %v816, 128
        %849 = vxpose.xlu0.b32.cont [4/16] %v817, 128
        %850 = vxpose.xlu0.b32.cont [5/16] %v818, 128
        %851 = vxpose.xlu0.b32.cont [6/16] %v819, 128
        %852 = vxpose.xlu0.b32.cont [7/16] %v820, 128
        %853 = vxpose.xlu0.b32.cont [8/16] %v821, 128
        %854 = vxpose.xlu0.b32.cont [9/16] %v822, 128
        %855 = vxpose.xlu0.b32.cont [10/16] %v823, 128
        %856 = vxpose.xlu0.b32.cont [11/16] %v824, 128
        %857 = vxpose.xlu0.b32.cont [12/16] %v825, 128
        %858 = vxpose.xlu0.b32.cont [13/16] %v826, 128
        %859 = vxpose.xlu0.b32.cont [14/16] %v827, 128
        %860 = vxpose.xlu0.b32.cont [15/16] %v828, 128
        %861 = vxpose.xlu0.b32.end [16/16] %v829, 128
        %v862 = vpop.trf.xlu0
        %v863 = vpop.trf.xlu0
        %v864 = vpop.trf.xlu0
        %v865 = vpop.trf.xlu0
        %v866 = vpop.trf.xlu0
        %v867 = vpop.trf.xlu0
        %v868 = vpop.trf.xlu0
        %v869 = vpop.trf.xlu0
        %v870 = vpop.trf.xlu0
        %v871 = vpop.trf.xlu0
        %v872 = vpop.trf.xlu0
        %v873 = vpop.trf.xlu0
        %v874 = vpop.trf.xlu0
        %v875 = vpop.trf.xlu0
        %v876 = vpop.trf.xlu0
        %v877 = vpop.trf.xlu0
        %878 = vxpose.xlu0.b32.start [1/16] %v830, 128
        %879 = vxpose.xlu0.b32.cont [2/16] %v831, 128
        %880 = vxpose.xlu0.b32.cont [3/16] %v832, 128
        %881 = vxpose.xlu0.b32.cont [4/16] %v833, 128
        %882 = vxpose.xlu0.b32.cont [5/16] %v834, 128
        %883 = vxpose.xlu0.b32.cont [6/16] %v835, 128
        %884 = vxpose.xlu0.b32.cont [7/16] %v836, 128
        %885 = vxpose.xlu0.b32.cont [8/16] %v837, 128
        %886 = vxpose.xlu0.b32.cont [9/16] %v838, 128
        %887 = vxpose.xlu0.b32.cont [10/16] %v839, 128
        %888 = vxpose.xlu0.b32.cont [11/16] %v840, 128
        %889 = vxpose.xlu0.b32.cont [12/16] %v841, 128
        %890 = vxpose.xlu0.b32.cont [13/16] %v842, 128
        %891 = vxpose.xlu0.b32.cont [14/16] %v843, 128
        %892 = vxpose.xlu0.b32.cont [15/16] %v844, 128
        %893 = vxpose.xlu0.b32.end [16/16] %v845, 128
        %v894 = vpop.trf.xlu0
        %v895 = vpop.trf.xlu0
        %v896 = vpop.trf.xlu0
        %v897 = vpop.trf.xlu0
        %v898 = vpop.trf.xlu0
        %v899 = vpop.trf.xlu0
        %v900 = vpop.trf.xlu0
        %v901 = vpop.trf.xlu0
        %v902 = vpop.trf.xlu0
        %v903 = vpop.trf.xlu0
        %v904 = vpop.trf.xlu0
        %v905 = vpop.trf.xlu0
        %v906 = vpop.trf.xlu0
        %v907 = vpop.trf.xlu0
        %v908 = vpop.trf.xlu0
        %v909 = vpop.trf.xlu0
        %910 = vst [vmem:[%s221] sm:$0xff] %v862
        %911 = vst [vmem:[%s221 + $0x8] sm:$0xff] %v894
        %912 = vst [vmem:[%s221 + $0x10] sm:$0xff] %v863
        %913 = vst [vmem:[%s221 + $0x18] sm:$0xff] %v895
        %914 = vst [vmem:[%s221 + $0x20] sm:$0xff] %v864
        %915 = vst [vmem:[%s221 + $0x28] sm:$0xff] %v896
        %916 = vst [vmem:[%s221 + $0x30] sm:$0xff] %v865
        %917 = vst [vmem:[%s221 + $0x38] sm:$0xff] %v897
        %918 = vst [vmem:[%s221 + $0x40] sm:$0xff] %v866
        %919 = vst [vmem:[%s221 + $0x48] sm:$0xff] %v898
        %920 = vst [vmem:[%s221 + $0x50] sm:$0xff] %v867
        %921 = vst [vmem:[%s221 + $0x58] sm:$0xff] %v899
        %922 = vst [vmem:[%s221 + $0x60] sm:$0xff] %v868
        %923 = vst [vmem:[%s221 + $0x68] sm:$0xff] %v900
        %924 = vst [vmem:[%s221 + $0x70] sm:$0xff] %v869
        %925 = vst [vmem:[%s221 + $0x78] sm:$0xff] %v901
        %926 = vst [vmem:[%s221 + $0x80] sm:$0xff] %v870
        %927 = vst [vmem:[%s221 + $0x88] sm:$0xff] %v902
        %928 = vst [vmem:[%s221 + $0x90] sm:$0xff] %v871
        %929 = vst [vmem:[%s221 + $0x98] sm:$0xff] %v903
        %930 = vst [vmem:[%s221 + $0xa0] sm:$0xff] %v872
        %931 = vst [vmem:[%s221 + $0xa8] sm:$0xff] %v904
        %932 = vst [vmem:[%s221 + $0xb0] sm:$0xff] %v873
        %933 = vst [vmem:[%s221 + $0xb8] sm:$0xff] %v905
        %934 = vst [vmem:[%s221 + $0xc0] sm:$0xff] %v874
        %935 = vst [vmem:[%s221 + $0xc8] sm:$0xff] %v906
        %936 = vst [vmem:[%s221 + $0xd0] sm:$0xff] %v875
        %937 = vst [vmem:[%s221 + $0xd8] sm:$0xff] %v907
        %938 = vst [vmem:[%s221 + $0xe0] sm:$0xff] %v876
        %939 = vst [vmem:[%s221 + $0xe8] sm:$0xff] %v908
        %940 = vst [vmem:[%s221 + $0xf0] sm:$0xff] %v877
        %941 = vst [vmem:[%s221 + $0xf8] sm:$0xff] %v909
        %s942 = sand.u32 %s113, 1
        %s943 = scalar_lea.sflag [#allocation4], %s942
        %s944 = sand.u32 %s113, 1
        %s945 = smul.addr %s944, 256
        %s946 = scalar_lea.vmem [#allocation7], %s945
        // Predicated region
        $region41: #{tpu_custom_call.1} parent=31 // pred_check
          %p947 = pneg %p123
        $region42: #{tpu_custom_call.1} parent=31 // pred_check_branch
          %949 = sbr.rel (%p947) target = $region44
        $region43: #{tpu_custom_call.1} parent=31 // pred_region
          %s950 = smul.u32 2, %s26
          %s952 = ssub.s32 4096, 4096
          %953 = vsyncadd %s943, %s952
          %s954 = smul.addr %s25, 64
          %s955 = sadd.s32 %s950, %s954
          %s956 = smul.addr %s955, 128
          %s957 = scalar_lea.hbm %s3, %s956
          %s958 = sshll.u32 %s946, 4
          %s959 = int_to_ptr.vmem [resolvable:$true] %s958
          %964 = dma.vmem_to_hbm [thread:$0]  %s959, 4096, %s957, %s943, 256, 512, 16
        $region44: #{tpu_custom_call.1} parent=31 // pred_fallthru
          _
      $region32: #{tpu_custom_call.1} parent=5 // pred_fallthru
        _
      %p965 = scmp.le.s32.totalorder 2, %s16
      // Predicated region
      $region45: #{tpu_custom_call.1} parent=5 // pred_check
        %p966 = pneg %p965
      $region46: #{tpu_custom_call.1} parent=5 // pred_check_branch
        %968 = sbr.rel (%p966) target = $region48
      $region47: #{tpu_custom_call.1} parent=5 // pred_region
        %s969 = ssub.s32 %s16, 2
        // Predicated region
        $region49: #{tpu_custom_call.1} parent=47 // pred_check
          %p970 = pneg %p129
        $region50: #{tpu_custom_call.1} parent=47 // pred_check_branch
          %972 = sbr.rel (%p970) target = $region52
        $region51: #{tpu_custom_call.1} parent=47 // pred_region
          %s973 = sand.u32 %s114, 1
          %s974 = scalar_lea.sflag [#allocation4], %s973
          %s975 = sand.u32 %s114, 1
          %s976 = smul.addr %s975, 256
          %s977 = scalar_lea.vmem [#allocation7], %s976
          %978 = dma.done %s974, 4096
        $region52: #{tpu_custom_call.1} parent=47 // pred_fallthru
          _
      $region48: #{tpu_custom_call.1} parent=5 // pred_fallthru
        _
    $region6: #{tpu_custom_call.1} parent=1 // loop_footer
      %s20 = sadd.s32 1, %s16
    $region7: #{tpu_custom_call.1} parent=1 // loop_footer_branch
      %15 = sbr.rel target = $region3
    $region8: #{tpu_custom_call.1} parent=1 // loop_exit
      _
    %979 = vsyncpa [#allocation3], 1
    %s980 = scalar_lea.sflag [#allocation3], 1
    %981 = vsyncpa %s980, 1
    %982 = vsyncpa [#allocation6], 1
    %983 = vsyncpa [#allocation4], 1
    %s984 = scalar_lea.sflag [#allocation4], 1
    %985 = vsyncpa %s984, 1

// kernel: tpu_custom_call.1
$region0: #{tpu_custom_call.1}
  #allocation0 [shape = 'u32[]', space=smem, size = 0x4, offset = 0x4, fixed_abs, tag = 'smem constant byte address 0x4 - core index']
  #allocation1 [shape = 'u32[144,128]{1,0:T(1,128)}', space=vmem, size = 0x12000, scoped, tag = 'internal scratch']
  %s0 = inlined_call_operand.hbm [shape: f32[2,512,128], index: 0, kind: input, shape index: {}]
  %s1 = inlined_call_operand.hbm [shape: bf16[2,128,128], index: 1, kind: input, shape index: {}]
  %s2 = inlined_call_operand.vmem [shape: f32[2,128], index: 2, kind: input, shape index: {}]
  %s3 = inlined_call_operand.hbm [shape: f32[2,128,512], index: 3, kind: output, shape index: {}]
  %s4 = sld [smem:[#allocation0]]
  $region53: #{tpu_custom_call.1} parent=0
    _
  %s6 = ssub.s32 1, %s4
  %s7 = scalar_select 0, %s6, %s4
  $region1: #{tpu_custom_call.1} parent=0
    #allocation2 [shape = 'u8[262144]{0}', space=vmem, size = 0x40000, scoped, tag = 'input window, operand 0']
    #allocation3 [shape = 's32[2]{0}', space=sflag, size = 0x8, scoped, tag = 'scoped memory for tpu_custom_call.1']
    #allocation4 [shape = 's32[2]{0}', space=sflag, size = 0x8, scoped, tag = 'scoped memory for tpu_custom_call.1']
    #allocation5 [shape = 'u8[65536]{0}', space=vmem, size = 0x10000, scoped, tag = 'input window, operand 1, single buffered']
    #allocation6 [shape = 's32[1]{0}', space=sflag, size = 0x4, scoped, tag = 'scoped memory for tpu_custom_call.1']
    #allocation7 [shape = 'u8[262144]{0}', space=vmem, size = 0x40000, scoped, tag = 'output window, operand 0']
    %8 = vsyncpa [#allocation3], 0
    %s9 = scalar_lea.sflag [#allocation3], 1
    %10 = vsyncpa %s9, 0
    %11 = vsyncpa [#allocation6], 0
    %12 = vsyncpa [#allocation4], 0
    %s13 = scalar_lea.sflag [#allocation4], 1
    %14 = vsyncpa %s13, 0
    loop: start=0, step=1, limit=6
    $region2: #{tpu_custom_call.1} parent=1 // loop_pre_header
      _
    $region3: #{tpu_custom_call.1} parent=1 // loop_header
      %s16 = sphi 0, %s20
      %p17 = scmp.ge.s32.totalorder %s16, 6
      %s23 = sphi 0, %s35
      %s24 = sphi 0, %s31
      %s25 = sphi 0, %s23
      %s26 = sphi 0, %s24
      %s27 = sphi 0, %s25
      %s28 = sphi 0, %s26
      %s40 = sphi 0, %s42
      %s43 = sphi 0, %s40
      %s44 = sphi 0, %s43
      %s60 = sphi 0, %s44
      %s64 = sphi 0, %s64
      %s66 = sphi 0, %s64
      %s67 = sphi 0, %s66
      %s81 = sphi 0, %s67
      %s85 = sphi 0, %s85
      %s87 = sphi 0, %s85
      %s88 = sphi 0, %s87
      %s102 = sphi 0, %s88
      %s110 = sphi 0, %s112
      %s113 = sphi 0, %s110
      %s114 = sphi 0, %s113
      %s130 = sphi 0, %s114
    $region4: #{tpu_custom_call.1} parent=1 // loop_header_branch
      %19 = sbr.rel (%p17) target = $region8
    $region5: #{tpu_custom_call.1} parent=1 // loop_body
      %s21 = ssub.s32 %s16, 1
      %s22 = ssub.s32 %s16, 2
      %s29 = sadd.s32 1, %s24
      %p30 = scmp.ge.s32.totalorder %s29, 2
      %s31 = scalar_select %p30, 0, %s29
      %s32 = sadd.s32 1, %s23
      %s33 = scalar_select %p30, %s32, %s23
      %p34 = scmp.ge.s32.totalorder %s33, 2
      %s35 = scalar_select %p34, 0, %s33
      %s36 = ssub.s32 %s23, %s35
      %s37 = ssub.s32 %s24, %s31
      %s38 = sor.u32 %s36, %s37
      %p39 = scmp.eq.s32.totalorder %s38, 0
      %s41 = sadd.s32 %s40, 1
      %s42 = scalar_select %p39, %s40, %s41
      %p45 = pneg %p39
      %p46 = scmp.eq.s32.totalorder %s16, 3
      %p47 = por %p45, %p46
      %p48 = scmp.ne.s32.totalorder %s40, %s43
      %p49 = scmp.eq.s32.totalorder %s16, 0
      %p50 = por %p48, %p49
      %p51 = scmp.ne.s32.totalorder %s40, %s43
      %p52 = scmp.eq.s32.totalorder %s21, 3
      %p53 = por %p51, %p52
      %p54 = scmp.ne.s32.totalorder %s43, %s44
      %p55 = scmp.eq.s32.totalorder %s21, 0
      %p56 = por %p54, %p55
      %p57 = scmp.ne.s32.totalorder %s43, %s44
      %p58 = scmp.eq.s32.totalorder %s22, 3
      %p59 = por %p57, %p58
      %p61 = scmp.ne.s32.totalorder %s44, %s60
      %p62 = scmp.eq.s32.totalorder %s22, 0
      %p63 = por %p61, %p62
      %s65 = sadd.s32 %s64, 1
      %p68 = scmp.eq.s32.totalorder %s16, 3
      %p69 = scmp.ne.s32.totalorder %s64, %s66
      %p70 = scmp.eq.s32.totalorder %s16, 0
      %p71 = por %p69, %p70
      %p72 = scmp.ne.s32.totalorder %s64, %s66
      %p73 = scmp.eq.s32.totalorder %s21, 3
      %p74 = por %p72, %p73
      %p75 = scmp.ne.s32.totalorder %s66, %s67
      %p76 = scmp.eq.s32.totalorder %s21, 0
      %p77 = por %p75, %p76
      %p78 = scmp.ne.s32.totalorder %s66, %s67
      %p79 = scmp.eq.s32.totalorder %s22, 3
      %p80 = por %p78, %p79
      %p82 = scmp.ne.s32.totalorder %s67, %s81
      %p83 = scmp.eq.s32.totalorder %s22, 0
      %p84 = por %p82, %p83
      %s86 = sadd.s32 %s85, 1
      %p89 = scmp.eq.s32.totalorder %s16, 3
      %p90 = scmp.ne.s32.totalorder %s85, %s87
      %p91 = scmp.eq.s32.totalorder %s16, 0
      %p92 = por %p90, %p91
      %p93 = scmp.ne.s32.totalorder %s85, %s87
      %p94 = scmp.eq.s32.totalorder %s21, 3
      %p95 = por %p93, %p94
      %p96 = scmp.ne.s32.totalorder %s87, %s88
      %p97 = scmp.eq.s32.totalorder %s21, 0
      %p98 = por %p96, %p97
      %p99 = scmp.ne.s32.totalorder %s87, %s88
      %p100 = scmp.eq.s32.totalorder %s22, 3
      %p101 = por %p99, %p100
      %p103 = scmp.ne.s32.totalorder %s88, %s102
      %p104 = scmp.eq.s32.totalorder %s22, 0
      %p105 = por %p103, %p104
      %s106 = ssub.s32 %s23, %s35
      %s107 = ssub.s32 %s24, %s31
      %s108 = sor.u32 %s106, %s107
      %p109 = scmp.eq.s32.totalorder %s108, 0
      %s111 = sadd.s32 %s110, 1
      %s112 = scalar_select %p109, %s110, %s111
      %p115 = pneg %p109
      %p116 = scmp.eq.s32.totalorder %s16, 3
      %p117 = por %p115, %p116
      %p118 = scmp.ne.s32.totalorder %s110, %s113
      %p119 = scmp.eq.s32.totalorder %s16, 0
      %p120 = por %p118, %p119
      %p121 = scmp.ne.s32.totalorder %s110, %s113
      %p122 = scmp.eq.s32.totalorder %s21, 3
      %p123 = por %p121, %p122
      %p124 = scmp.ne.s32.totalorder %s113, %s114
      %p125 = scmp.eq.s32.totalorder %s21, 0
      %p126 = por %p124, %p125
      %p127 = scmp.ne.s32.totalorder %s113, %s114
      %p128 = scmp.eq.s32.totalorder %s22, 3
      %p129 = por %p127, %p128
      %p131 = scmp.ne.s32.totalorder %s114, %s130
      %p132 = scmp.eq.s32.totalorder %s22, 0
      %p133 = por %p131, %p132
      %p134 = scmp.le.s32.totalorder 1, %s16
      %p135 = scmp.lt.s32.totalorder %s16, 5
      %p136 = pnand %p134, %p135
      %p137 = pneg %p136
      // Predicated region
      $region9: #{tpu_custom_call.1} parent=5 // pred_check
        _
      $region10: #{tpu_custom_call.1} parent=5 // pred_check_branch
        %139 = sbr.rel (%p136) target = $region12
      $region11: #{tpu_custom_call.1} parent=5 // pred_region
        %s140 = ssub.s32 %s16, 1
        // Predicated region
        $region13: #{tpu_custom_call.1} parent=11 // pred_check
          %p141 = pneg %p77
        $region14: #{tpu_custom_call.1} parent=11 // pred_check_branch
          %143 = sbr.rel (%p141) target = $region16
        $region15: #{tpu_custom_call.1} parent=11 // pred_region
          %s145 = ssub.s32 2048, 2048
          %146 = vsyncadd [#allocation6], %s145
          %s147 = sshll.u32 [#allocation5], 4
          %s148 = int_to_ptr.vmem [resolvable:$true] %s147
          %153 = dma.hbm_to_vmem [thread:$0]  %s1, 2048, %s148, [#allocation6], 64, 64, 4
        $region16: #{tpu_custom_call.1} parent=11 // pred_fallthru
          _
        // Predicated region
        $region17: #{tpu_custom_call.1} parent=11 // pred_check
          %p154 = pneg %p98
        $region18: #{tpu_custom_call.1} parent=11 // pred_check_branch
          %156 = sbr.rel (%p154) target = $region20
        $region19: #{tpu_custom_call.1} parent=11 // pred_region
          _
        $region20: #{tpu_custom_call.1} parent=11 // pred_fallthru
          _
      $region12: #{tpu_custom_call.1} parent=5 // pred_fallthru
        _
      %p157 = scmp.lt.s32.totalorder %s16, 4
      // Predicated region
      $region21: #{tpu_custom_call.1} parent=5 // pred_check
        %p158 = pneg %p157
      $region22: #{tpu_custom_call.1} parent=5 // pred_check_branch
        %160 = sbr.rel (%p158) target = $region24
      $region23: #{tpu_custom_call.1} parent=5 // pred_region
        // Predicated region
        $region25: #{tpu_custom_call.1} parent=23 // pred_check
          %p161 = pneg %p50
        $region26: #{tpu_custom_call.1} parent=23 // pred_check_branch
          %163 = sbr.rel (%p161) target = $region28
        $region27: #{tpu_custom_call.1} parent=23 // pred_region
          %s164 = sand.u32 %s40, 1
          %s165 = scalar_lea.sflag [#allocation3], %s164
          %s166 = sand.u32 %s40, 1
          %s167 = smul.addr %s166, 256
          %s168 = scalar_lea.vmem [#allocation2], %s167
          %s169 = smul.u32 32, %s24
          %s171 = ssub.s32 4096, 4096
          %172 = vsyncadd %s165, %s171
          %s173 = smul.addr %s23, 64
          %s174 = sadd.s32 %s169, %s173
          %s175 = smul.addr %s174, 128
          %s176 = scalar_lea.hbm %s0, %s175
          %s177 = sshll.u32 %s168, 4
          %s178 = int_to_ptr.vmem [resolvable:$true] %s177
          %183 = dma.hbm_to_vmem [thread:$0]  %s176, 4096, %s178, %s165, 128, 128, 8
        $region28: #{tpu_custom_call.1} parent=23 // pred_fallthru
          _
      $region24: #{tpu_custom_call.1} parent=5 // pred_fallthru
        _
      %p184 = scmp.le.s32.totalorder 1, %s16
      %p185 = scmp.lt.s32.totalorder %s16, 5
      %p186 = pnand %p184, %p185
      %p187 = pneg %p186
      // Predicated region
      $region29: #{tpu_custom_call.1} parent=5 // pred_check
        _
      $region30: #{tpu_custom_call.1} parent=5 // pred_check_branch
        %189 = sbr.rel (%p186) target = $region32
      $region31: #{tpu_custom_call.1} parent=5 // pred_region
        %s190 = ssub.s32 %s16, 1
        %s191 = sand.u32 %s43, 1
        %s192 = scalar_lea.sflag [#allocation3], %s191
        %s193 = sand.u32 %s43, 1
        %s194 = smul.addr %s193, 256
        %s195 = scalar_lea.vmem [#allocation2], %s194
        // Predicated region
        $region33: #{tpu_custom_call.1} parent=31 // pred_check
          %p196 = pneg %p56
        $region34: #{tpu_custom_call.1} parent=31 // pred_check_branch
          %198 = sbr.rel (%p196) target = $region36
        $region35: #{tpu_custom_call.1} parent=31 // pred_region
          %199 = dma.done %s192, 4096
        $region36: #{tpu_custom_call.1} parent=31 // pred_fallthru
          _
        // Predicated region
        $region37: #{tpu_custom_call.1} parent=31 // pred_check
          %p200 = pneg %p77
        $region38: #{tpu_custom_call.1} parent=31 // pred_check_branch
          %202 = sbr.rel (%p200) target = $region40
        $region39: #{tpu_custom_call.1} parent=31 // pred_region
          %203 = dma.done [#allocation6], 2048
        $region40: #{tpu_custom_call.1} parent=31 // pred_fallthru
          _
        %s204 = sand.u32 %s43, 1
        %s205 = scalar_lea.sflag [#allocation3], %s204
        %s206 = sand.u32 %s43, 1
        %s207 = smul.addr %s206, 256
        %s208 = scalar_lea.vmem [#allocation2], %s207
        %p209 = pneg %p56
        %p210 = pneg %p53
        %p211 = pneg %p77
        %p212 = pneg %p74
        %p213 = pneg %p98
        %p214 = pneg %p95
        %p215 = pneg %p126
        %p216 = pneg %p123
        %s217 = sand.u32 %s113, 1
        %s218 = scalar_lea.sflag [#allocation4], %s217
        %s219 = sand.u32 %s113, 1
        %s220 = smul.addr %s219, 256
        %s221 = scalar_lea.vmem [#allocation7], %s220
        %s222 = smul.u32 32, %s26
        %s223 = smul.u32 2, %s26
        %v225 = vld [vmem:[%s195] sm:$0xff]
        %v226 = vld [vmem:[%s195 + $0x8] sm:$0xff]
        %v227 = vld [vmem:[%s195 + $0x10] sm:$0xff]
        %v228 = vld [vmem:[%s195 + $0x18] sm:$0xff]
        %v229 = vld [vmem:[%s195 + $0x20] sm:$0xff]
        %v230 = vld [vmem:[%s195 + $0x28] sm:$0xff]
        %v231 = vld [vmem:[%s195 + $0x30] sm:$0xff]
        %v232 = vld [vmem:[%s195 + $0x38] sm:$0xff]
        %v233 = vld [vmem:[%s195 + $0x40] sm:$0xff]
        %v234 = vld [vmem:[%s195 + $0x48] sm:$0xff]
        %v235 = vld [vmem:[%s195 + $0x50] sm:$0xff]
        %v236 = vld [vmem:[%s195 + $0x58] sm:$0xff]
        %v237 = vld [vmem:[%s195 + $0x60] sm:$0xff]
        %v238 = vld [vmem:[%s195 + $0x68] sm:$0xff]
        %v239 = vld [vmem:[%s195 + $0x70] sm:$0xff]
        %v240 = vld [vmem:[%s195 + $0x78] sm:$0xff]
        %v241 = vld [vmem:[%s195 + $0x80] sm:$0xff]
        %v242 = vld [vmem:[%s195 + $0x88] sm:$0xff]
        %v243 = vld [vmem:[%s195 + $0x90] sm:$0xff]
        %v244 = vld [vmem:[%s195 + $0x98] sm:$0xff]
        %v245 = vld [vmem:[%s195 + $0xa0] sm:$0xff]
        %v246 = vld [vmem:[%s195 + $0xa8] sm:$0xff]
        %v247 = vld [vmem:[%s195 + $0xb0] sm:$0xff]
        %v248 = vld [vmem:[%s195 + $0xb8] sm:$0xff]
        %v249 = vld [vmem:[%s195 + $0xc0] sm:$0xff]
        %v250 = vld [vmem:[%s195 + $0xc8] sm:$0xff]
        %v251 = vld [vmem:[%s195 + $0xd0] sm:$0xff]
        %v252 = vld [vmem:[%s195 + $0xd8] sm:$0xff]
        %v253 = vld [vmem:[%s195 + $0xe0] sm:$0xff]
        %v254 = vld [vmem:[%s195 + $0xe8] sm:$0xff]
        %v255 = vld [vmem:[%s195 + $0xf0] sm:$0xff]
        %v256 = vld [vmem:[%s195 + $0xf8] sm:$0xff]
        %v257 = vpack.c.bf16 %v226, %v225
        %v258 = vpack.c.bf16 %v228, %v227
        %v259 = vpack.c.bf16 %v230, %v229
        %v260 = vpack.c.bf16 %v232, %v231
        %v261 = vpack.c.bf16 %v234, %v233
        %v262 = vpack.c.bf16 %v236, %v235
        %v263 = vpack.c.bf16 %v238, %v237
        %v264 = vpack.c.bf16 %v240, %v239
        %v265 = vpack.c.bf16 %v242, %v241
        %v266 = vpack.c.bf16 %v244, %v243
        %v267 = vpack.c.bf16 %v246, %v245
        %v268 = vpack.c.bf16 %v248, %v247
        %v269 = vpack.c.bf16 %v250, %v249
        %v270 = vpack.c.bf16 %v252, %v251
        %v271 = vpack.c.bf16 %v254, %v253
        %v272 = vpack.c.bf16 %v256, %v255
        %v273 = vld [vmem:[#allocation5] sm:$0xf]
        %v274 = vld [vmem:[#allocation5 + $0x4] sm:$0xf]
        %v275 = vld [vmem:[#allocation5 + $0x8] sm:$0xf]
        %v276 = vld [vmem:[#allocation5 + $0xc] sm:$0xf]
        %v277 = vld [vmem:[#allocation5 + $0x10] sm:$0xf]
        %v278 = vld [vmem:[#allocation5 + $0x14] sm:$0xf]
        %v279 = vld [vmem:[#allocation5 + $0x18] sm:$0xf]
        %v280 = vld [vmem:[#allocation5 + $0x1c] sm:$0xf]
        %v281 = vld [vmem:[#allocation5 + $0x20] sm:$0xf]
        %v282 = vld [vmem:[#allocation5 + $0x24] sm:$0xf]
        %v283 = vld [vmem:[#allocation5 + $0x28] sm:$0xf]
        %v284 = vld [vmem:[#allocation5 + $0x2c] sm:$0xf]
        %v285 = vld [vmem:[#allocation5 + $0x30] sm:$0xf]
        %v286 = vld [vmem:[#allocation5 + $0x34] sm:$0xf]
        %v287 = vld [vmem:[#allocation5 + $0x38] sm:$0xf]
        %v288 = vld [vmem:[#allocation5 + $0x3c] sm:$0xf]
        %v289 = vld [vmem:[%s2] sm:$0x1]
        %v290 = vlaneseq
        %v291 = vshrl.u32 %v290, 7
        %v292 = vsub.s32 0, %v291
        %v293 = vrot.slane %v289, %v292
        %v310 = vunpack.c.l.b16 %v273
        %v311 = vunpack.c.l.b16 %v274
        %v312 = vunpack.c.l.b16 %v275
        %v313 = vunpack.c.l.b16 %v276
        %v314 = vunpack.c.l.b16 %v277
        %v315 = vunpack.c.l.b16 %v278
        %v316 = vunpack.c.l.b16 %v279
        %v317 = vunpack.c.l.b16 %v280
        %v318 = vunpack.c.l.b16 %v281
        %v319 = vunpack.c.l.b16 %v282
        %v320 = vunpack.c.l.b16 %v283
        %v321 = vunpack.c.l.b16 %v284
        %v322 = vunpack.c.l.b16 %v285
        %v323 = vunpack.c.l.b16 %v286
        %v324 = vunpack.c.l.b16 %v287
        %v325 = vunpack.c.l.b16 %v288
        %v326 = vpack.c.b16 %v311, %v310
        %v327 = vpack.c.b16 %v313, %v312
        %v328 = vpack.c.b16 %v315, %v314
        %v329 = vpack.c.b16 %v317, %v316
        %v330 = vpack.c.b16 %v319, %v318
        %v331 = vpack.c.b16 %v321, %v320
        %v332 = vpack.c.b16 %v323, %v322
        %v333 = vpack.c.b16 %v325, %v324
        %342 = vmatprep.subr.bf16.mxu0 0
        %343 = vmatpush1.bf16.msra.mxu0 %v333
        %344 = vmatprep.subr.bf16.mxu0 0
        %345 = vmatpush1.bf16.msra.mxu0 %v332
        %346 = vmatprep.subr.bf16.mxu0 0
        %347 = vmatpush1.bf16.msra.mxu0 %v331
        %348 = vmatprep.subr.bf16.mxu0 0
        %349 = vmatpush1.bf16.msra.mxu0 %v330
        %350 = vmatprep.subr.bf16.mxu0 0
        %351 = vmatpush1.bf16.msra.mxu0 %v329
        %352 = vmatprep.subr.bf16.mxu0 0
        %353 = vmatpush1.bf16.msra.mxu0 %v328
        %354 = vmatprep.subr.bf16.mxu0 0
        %355 = vmatpush1.bf16.msra.mxu0 %v327
        %356 = vmatprep.subr.bf16.mxu0 0
        %357 = vmatpush1.bf16.msra.mxu0 %v326
        %358 = vmatprep.subr.bf16.mxu0 0
        %359 = vmatpush2.bf16.msra.mxu0 0
        %360 = vmatprep.subr.bf16.mxu0 0
        %361 = vmatpush2.bf16.msra.mxu0 0
        %362 = vmatprep.subr.bf16.mxu0 0
        %363 = vmatpush2.bf16.msra.mxu0 0
        %364 = vmatprep.subr.bf16.mxu0 0
        %365 = vmatpush2.bf16.msra.mxu0 0
        %366 = vmatprep.subr.bf16.mxu0 0
        %367 = vmatpush2.bf16.msra.mxu0 0
        %368 = vmatprep.subr.bf16.mxu0 0
        %369 = vmatpush2.bf16.msra.mxu0 0
        %370 = vmatprep.subr.bf16.mxu0 0
        %371 = vmatpush2.bf16.msra.mxu0 0
        %372 = vmatprep.subr.bf16.mxu0 0
        %373 = vmatpush2.bf16.msra.mxu0 0
        %374 = vmatprep.mubr.bf16.mxu0 0
        %375 = vmatmul.mubr.bf16.gmra.mxu0 %v257
        %v376 = vpop.f32.mrf.mxu0
        %v377 = vadd.f32 %v293, %v376
        %v378 = vpop.f32.mrf.mxu0
        %v379 = vpop.f32.mrf.mxu0
        %v380 = vadd.f32 %v293, %v379
        %v381 = vpop.f32.mrf.mxu0
        %382 = vmatprep.mubr.bf16.mxu0 0
        %383 = vmatmul.mubr.bf16.gmra.mxu0 %v258
        %v384 = vpop.f32.mrf.mxu0
        %v385 = vadd.f32 %v293, %v384
        %v386 = vpop.f32.mrf.mxu0
        %v387 = vpop.f32.mrf.mxu0
        %v388 = vadd.f32 %v293, %v387
        %v389 = vpop.f32.mrf.mxu0
        %390 = vmatprep.mubr.bf16.mxu0 0
        %391 = vmatmul.mubr.bf16.gmra.mxu0 %v259
        %v392 = vpop.f32.mrf.mxu0
        %v393 = vadd.f32 %v293, %v392
        %v394 = vpop.f32.mrf.mxu0
        %v395 = vpop.f32.mrf.mxu0
        %v396 = vadd.f32 %v293, %v395
        %v397 = vpop.f32.mrf.mxu0
        %398 = vmatprep.mubr.bf16.mxu0 0
        %399 = vmatmul.mubr.bf16.gmra.mxu0 %v260
        %v400 = vpop.f32.mrf.mxu0
        %v401 = vadd.f32 %v293, %v400
        %v402 = vpop.f32.mrf.mxu0
        %v403 = vpop.f32.mrf.mxu0
        %v404 = vadd.f32 %v293, %v403
        %v405 = vpop.f32.mrf.mxu0
        %406 = vmatprep.mubr.bf16.mxu0 0
        %407 = vmatmul.mubr.bf16.gmra.mxu0 %v261
        %v408 = vpop.f32.mrf.mxu0
        %v409 = vadd.f32 %v293, %v408
        %v410 = vpop.f32.mrf.mxu0
        %v411 = vpop.f32.mrf.mxu0
        %v412 = vadd.f32 %v293, %v411
        %v413 = vpop.f32.mrf.mxu0
        %414 = vmatprep.mubr.bf16.mxu0 0
        %415 = vmatmul.mubr.bf16.gmra.mxu0 %v262
        %v416 = vpop.f32.mrf.mxu0
        %v417 = vadd.f32 %v293, %v416
        %v418 = vpop.f32.mrf.mxu0
        %v419 = vpop.f32.mrf.mxu0
        %v420 = vadd.f32 %v293, %v419
        %v421 = vpop.f32.mrf.mxu0
        %422 = vmatprep.mubr.bf16.mxu0 0
        %423 = vmatmul.mubr.bf16.gmra.mxu0 %v263
        %v424 = vpop.f32.mrf.mxu0
        %v425 = vadd.f32 %v293, %v424
        %v426 = vpop.f32.mrf.mxu0
        %v427 = vpop.f32.mrf.mxu0
        %v428 = vadd.f32 %v293, %v427
        %v429 = vpop.f32.mrf.mxu0
        %430 = vmatprep.mubr.bf16.mxu0 0
        %431 = vmatmul.mubr.bf16.gmra.mxu0 %v264
        %v432 = vpop.f32.mrf.mxu0
        %v433 = vadd.f32 %v293, %v432
        %v434 = vpop.f32.mrf.mxu0
        %v435 = vpop.f32.mrf.mxu0
        %v436 = vadd.f32 %v293, %v435
        %v437 = vpop.f32.mrf.mxu0
        %438 = vmatprep.mubr.bf16.mxu0 0
        %439 = vmatmul.mubr.bf16.gmra.mxu0 %v265
        %v440 = vpop.f32.mrf.mxu0
        %v441 = vadd.f32 %v293, %v440
        %v442 = vpop.f32.mrf.mxu0
        %v443 = vpop.f32.mrf.mxu0
        %v444 = vadd.f32 %v293, %v443
        %v445 = vpop.f32.mrf.mxu0
        %446 = vmatprep.mubr.bf16.mxu0 0
        %447 = vmatmul.mubr.bf16.gmra.mxu0 %v266
        %v448 = vpop.f32.mrf.mxu0
        %v449 = vadd.f32 %v293, %v448
        %v450 = vpop.f32.mrf.mxu0
        %v451 = vpop.f32.mrf.mxu0
        %v452 = vadd.f32 %v293, %v451
        %v453 = vpop.f32.mrf.mxu0
        %454 = vmatprep.mubr.bf16.mxu0 0
        %455 = vmatmul.mubr.bf16.gmra.mxu0 %v267
        %v456 = vpop.f32.mrf.mxu0
        %v457 = vadd.f32 %v293, %v456
        %v458 = vpop.f32.mrf.mxu0
        %v459 = vpop.f32.mrf.mxu0
        %v460 = vadd.f32 %v293, %v459
        %v461 = vpop.f32.mrf.mxu0
        %462 = vmatprep.mubr.bf16.mxu0 0
        %463 = vmatmul.mubr.bf16.gmra.mxu0 %v268
        %v464 = vpop.f32.mrf.mxu0
        %v465 = vadd.f32 %v293, %v464
        %v466 = vpop.f32.mrf.mxu0
        %v467 = vpop.f32.mrf.mxu0
        %v468 = vadd.f32 %v293, %v467
        %v469 = vpop.f32.mrf.mxu0
        %470 = vmatprep.mubr.bf16.mxu0 0
        %471 = vmatmul.mubr.bf16.gmra.mxu0 %v269
        %v472 = vpop.f32.mrf.mxu0
        %v473 = vadd.f32 %v293, %v472
        %v474 = vpop.f32.mrf.mxu0
        %v475 = vpop.f32.mrf.mxu0
        %v476 = vadd.f32 %v293, %v475
        %v477 = vpop.f32.mrf.mxu0
        %478 = vmatprep.mubr.bf16.mxu0 0
        %479 = vmatmul.mubr.bf16.gmra.mxu0 %v270
        %v480 = vpop.f32.mrf.mxu0
        %v481 = vadd.f32 %v293, %v480
        %v482 = vpop.f32.mrf.mxu0
        %v483 = vpop.f32.mrf.mxu0
        %v484 = vadd.f32 %v293, %v483
        %v485 = vpop.f32.mrf.mxu0
        %486 = vmatprep.mubr.bf16.mxu0 0
        %487 = vmatmul.mubr.bf16.gmra.mxu0 %v271
        %v488 = vpop.f32.mrf.mxu0
        %v489 = vadd.f32 %v293, %v488
        %v490 = vpop.f32.mrf.mxu0
        %v491 = vpop.f32.mrf.mxu0
        %v492 = vadd.f32 %v293, %v491
        %v493 = vpop.f32.mrf.mxu0
        %494 = vmatprep.mubr.bf16.mxu0 0
        %495 = vmatmul.mubr.bf16.gmra.mxu0 %v272
        %v496 = vpop.f32.mrf.mxu0
        %v497 = vadd.f32 %v293, %v496
        %v498 = vpop.f32.mrf.mxu0
        %v499 = vpop.f32.mrf.mxu0
        %v500 = vadd.f32 %v293, %v499
        %v501 = vpop.f32.mrf.mxu0
        %502 = vdwg.mxu0
        %v503 = vmax.f32 %v377, 0.0
        %v504 = vmax.f32 %v380, 0.0
        %v505 = vmax.f32 %v385, 0.0
        %v506 = vmax.f32 %v388, 0.0
        %v507 = vmax.f32 %v393, 0.0
        %v508 = vmax.f32 %v396, 0.0
        %v509 = vmax.f32 %v401, 0.0
        %v510 = vmax.f32 %v404, 0.0
        %v511 = vmax.f32 %v409, 0.0
        %v512 = vmax.f32 %v412, 0.0
        %v513 = vmax.f32 %v417, 0.0
        %v514 = vmax.f32 %v420, 0.0
        %v515 = vmax.f32 %v425, 0.0
        %v516 = vmax.f32 %v428, 0.0
        %v517 = vmax.f32 %v433, 0.0
        %v518 = vmax.f32 %v436, 0.0
        %v519 = vmax.f32 %v441, 0.0
        %v520 = vmax.f32 %v444, 0.0
        %v521 = vmax.f32 %v449, 0.0
        %v522 = vmax.f32 %v452, 0.0
        %v523 = vmax.f32 %v457, 0.0
        %v524 = vmax.f32 %v460, 0.0
        %v525 = vmax.f32 %v465, 0.0
        %v526 = vmax.f32 %v468, 0.0
        %v527 = vmax.f32 %v473, 0.0
        %v528 = vmax.f32 %v476, 0.0
        %v529 = vmax.f32 %v481, 0.0
        %v530 = vmax.f32 %v484, 0.0
        %v531 = vmax.f32 %v489, 0.0
        %v532 = vmax.f32 %v492, 0.0
        %v533 = vmax.f32 %v497, 0.0
        %v534 = vmax.f32 %v500, 0.0
        %v535 = vpack.c.bf16 %v504, %v503
        %v536 = vpack.c.bf16 %v506, %v505
        %v537 = vpack.c.bf16 %v508, %v507
        %v538 = vpack.c.bf16 %v510, %v509
        %v539 = vpack.c.bf16 %v512, %v511
        %v540 = vpack.c.bf16 %v514, %v513
        %v541 = vpack.c.bf16 %v516, %v515
        %v542 = vpack.c.bf16 %v518, %v517
        %v543 = vpack.c.bf16 %v520, %v519
        %v544 = vpack.c.bf16 %v522, %v521
        %v545 = vpack.c.bf16 %v524, %v523
        %v546 = vpack.c.bf16 %v526, %v525
        %v547 = vpack.c.bf16 %v528, %v527
        %v548 = vpack.c.bf16 %v530, %v529
        %v549 = vpack.c.bf16 %v532, %v531
        %v550 = vpack.c.bf16 %v534, %v533
        %s551 = scalar_lea.vmem [#allocation5], 64
        %v552 = vld [vmem:[%s551] sm:$0xf]
        %v553 = vld [vmem:[%s551 + $0x4] sm:$0xf]
        %v554 = vld [vmem:[%s551 + $0x8] sm:$0xf]
        %v555 = vld [vmem:[%s551 + $0xc] sm:$0xf]
        %v556 = vld [vmem:[%s551 + $0x10] sm:$0xf]
        %v557 = vld [vmem:[%s551 + $0x14] sm:$0xf]
        %v558 = vld [vmem:[%s551 + $0x18] sm:$0xf]
        %v559 = vld [vmem:[%s551 + $0x1c] sm:$0xf]
        %v560 = vld [vmem:[%s551 + $0x20] sm:$0xf]
        %v561 = vld [vmem:[%s551 + $0x24] sm:$0xf]
        %v562 = vld [vmem:[%s551 + $0x28] sm:$0xf]
        %v563 = vld [vmem:[%s551 + $0x2c] sm:$0xf]
        %v564 = vld [vmem:[%s551 + $0x30] sm:$0xf]
        %v565 = vld [vmem:[%s551 + $0x34] sm:$0xf]
        %v566 = vld [vmem:[%s551 + $0x38] sm:$0xf]
        %v567 = vld [vmem:[%s551 + $0x3c] sm:$0xf]
        %v568 = vld [vmem:[%s2 + $0x1] sm:$0x1]
        %v569 = vlaneseq
        %v570 = vshrl.u32 %v569, 7
        %v571 = vsub.s32 0, %v570
        %v572 = vrot.slane %v568, %v571
        %v589 = vunpack.c.l.b16 %v552
        %v590 = vunpack.c.l.b16 %v553
        %v591 = vunpack.c.l.b16 %v554
        %v592 = vunpack.c.l.b16 %v555
        %v593 = vunpack.c.l.b16 %v556
        %v594 = vunpack.c.l.b16 %v557
        %v595 = vunpack.c.l.b16 %v558
        %v596 = vunpack.c.l.b16 %v559
        %v597 = vunpack.c.l.b16 %v560
        %v598 = vunpack.c.l.b16 %v561
        %v599 = vunpack.c.l.b16 %v562
        %v600 = vunpack.c.l.b16 %v563
        %v601 = vunpack.c.l.b16 %v564
        %v602 = vunpack.c.l.b16 %v565
        %v603 = vunpack.c.l.b16 %v566
        %v604 = vunpack.c.l.b16 %v567
        %v605 = vpack.c.b16 %v590, %v589
        %v606 = vpack.c.b16 %v592, %v591
        %v607 = vpack.c.b16 %v594, %v593
        %v608 = vpack.c.b16 %v596, %v595
        %v609 = vpack.c.b16 %v598, %v597
        %v610 = vpack.c.b16 %v600, %v599
        %v611 = vpack.c.b16 %v602, %v601
        %v612 = vpack.c.b16 %v604, %v603
        %621 = vmatprep.subr.bf16.mxu0 0
        %622 = vmatpush1.bf16.msra.mxu0 %v612
        %623 = vmatprep.subr.bf16.mxu0 0
        %624 = vmatpush1.bf16.msra.mxu0 %v611
        %625 = vmatprep.subr.bf16.mxu0 0
        %626 = vmatpush1.bf16.msra.mxu0 %v610
        %627 = vmatprep.subr.bf16.mxu0 0
        %628 = vmatpush1.bf16.msra.mxu0 %v609
        %629 = vmatprep.subr.bf16.mxu0 0
        %630 = vmatpush1.bf16.msra.mxu0 %v608
        %631 = vmatprep.subr.bf16.mxu0 0
        %632 = vmatpush1.bf16.msra.mxu0 %v607
        %633 = vmatprep.subr.bf16.mxu0 0
        %634 = vmatpush1.bf16.msra.mxu0 %v606
        %635 = vmatprep.subr.bf16.mxu0 0
        %636 = vmatpush1.bf16.msra.mxu0 %v605
        %637 = vmatprep.subr.bf16.mxu0 0
        %638 = vmatpush2.bf16.msra.mxu0 0
        %639 = vmatprep.subr.bf16.mxu0 0
        %640 = vmatpush2.bf16.msra.mxu0 0
        %641 = vmatprep.subr.bf16.mxu0 0
        %642 = vmatpush2.bf16.msra.mxu0 0
        %643 = vmatprep.subr.bf16.mxu0 0
        %644 = vmatpush2.bf16.msra.mxu0 0
        %645 = vmatprep.subr.bf16.mxu0 0
        %646 = vmatpush2.bf16.msra.mxu0 0
        %647 = vmatprep.subr.bf16.mxu0 0
        %648 = vmatpush2.bf16.msra.mxu0 0
        %649 = vmatprep.subr.bf16.mxu0 0
        %650 = vmatpush2.bf16.msra.mxu0 0
        %651 = vmatprep.subr.bf16.mxu0 0
        %652 = vmatpush2.bf16.msra.mxu0 0
        %653 = vmatprep.mubr.bf16.mxu0 0
        %654 = vmatmul.mubr.bf16.gmra.mxu0 %v535
        %v655 = vpop.f32.mrf.mxu0
        %v656 = vadd.f32 %v572, %v655
        %v657 = vpop.f32.mrf.mxu0
        %v658 = vpop.f32.mrf.mxu0
        %v659 = vadd.f32 %v572, %v658
        %v660 = vpop.f32.mrf.mxu0
        %661 = vmatprep.mubr.bf16.mxu0 0
        %662 = vmatmul.mubr.bf16.gmra.mxu0 %v536
        %v663 = vpop.f32.mrf.mxu0
        %v664 = vadd.f32 %v572, %v663
        %v665 = vpop.f32.mrf.mxu0
        %v666 = vpop.f32.mrf.mxu0
        %v667 = vadd.f32 %v572, %v666
        %v668 = vpop.f32.mrf.mxu0
        %669 = vmatprep.mubr.bf16.mxu0 0
        %670 = vmatmul.mubr.bf16.gmra.mxu0 %v537
        %v671 = vpop.f32.mrf.mxu0
        %v672 = vadd.f32 %v572, %v671
        %v673 = vpop.f32.mrf.mxu0
        %v674 = vpop.f32.mrf.mxu0
        %v675 = vadd.f32 %v572, %v674
        %v676 = vpop.f32.mrf.mxu0
        %677 = vmatprep.mubr.bf16.mxu0 0
        %678 = vmatmul.mubr.bf16.gmra.mxu0 %v538
        %v679 = vpop.f32.mrf.mxu0
        %v680 = vadd.f32 %v572, %v679
        %v681 = vpop.f32.mrf.mxu0
        %v682 = vpop.f32.mrf.mxu0
        %v683 = vadd.f32 %v572, %v682
        %v684 = vpop.f32.mrf.mxu0
        %685 = vmatprep.mubr.bf16.mxu0 0
        %686 = vmatmul.mubr.bf16.gmra.mxu0 %v539
        %v687 = vpop.f32.mrf.mxu0
        %v688 = vadd.f32 %v572, %v687
        %v689 = vpop.f32.mrf.mxu0
        %v690 = vpop.f32.mrf.mxu0
        %v691 = vadd.f32 %v572, %v690
        %v692 = vpop.f32.mrf.mxu0
        %693 = vmatprep.mubr.bf16.mxu0 0
        %694 = vmatmul.mubr.bf16.gmra.mxu0 %v540
        %v695 = vpop.f32.mrf.mxu0
        %v696 = vadd.f32 %v572, %v695
        %v697 = vpop.f32.mrf.mxu0
        %v698 = vpop.f32.mrf.mxu0
        %v699 = vadd.f32 %v572, %v698
        %v700 = vpop.f32.mrf.mxu0
        %701 = vmatprep.mubr.bf16.mxu0 0
        %702 = vmatmul.mubr.bf16.gmra.mxu0 %v541
        %v703 = vpop.f32.mrf.mxu0
        %v704 = vadd.f32 %v572, %v703
        %v705 = vpop.f32.mrf.mxu0
        %v706 = vpop.f32.mrf.mxu0
        %v707 = vadd.f32 %v572, %v706
        %v708 = vpop.f32.mrf.mxu0
        %709 = vmatprep.mubr.bf16.mxu0 0
        %710 = vmatmul.mubr.bf16.gmra.mxu0 %v542
        %v711 = vpop.f32.mrf.mxu0
        %v712 = vadd.f32 %v572, %v711
        %v713 = vpop.f32.mrf.mxu0
        %v714 = vpop.f32.mrf.mxu0
        %v715 = vadd.f32 %v572, %v714
        %v716 = vpop.f32.mrf.mxu0
        %717 = vmatprep.mubr.bf16.mxu0 0
        %718 = vmatmul.mubr.bf16.gmra.mxu0 %v543
        %v719 = vpop.f32.mrf.mxu0
        %v720 = vadd.f32 %v572, %v719
        %v721 = vpop.f32.mrf.mxu0
        %v722 = vpop.f32.mrf.mxu0
        %v723 = vadd.f32 %v572, %v722
        %v724 = vpop.f32.mrf.mxu0
        %725 = vmatprep.mubr.bf16.mxu0 0
        %726 = vmatmul.mubr.bf16.gmra.mxu0 %v544
        %v727 = vpop.f32.mrf.mxu0
        %v728 = vadd.f32 %v572, %v727
        %v729 = vpop.f32.mrf.mxu0
        %v730 = vpop.f32.mrf.mxu0
        %v731 = vadd.f32 %v572, %v730
        %v732 = vpop.f32.mrf.mxu0
        %733 = vmatprep.mubr.bf16.mxu0 0
        %734 = vmatmul.mubr.bf16.gmra.mxu0 %v545
        %v735 = vpop.f32.mrf.mxu0
        %v736 = vadd.f32 %v572, %v735
        %v737 = vpop.f32.mrf.mxu0
        %v738 = vpop.f32.mrf.mxu0
        %v739 = vadd.f32 %v572, %v738
        %v740 = vpop.f32.mrf.mxu0
        %741 = vmatprep.mubr.bf16.mxu0 0
        %742 = vmatmul.mubr.bf16.gmra.mxu0 %v546
        %v743 = vpop.f32.mrf.mxu0
        %v744 = vadd.f32 %v572, %v743
        %v745 = vpop.f32.mrf.mxu0
        %v746 = vpop.f32.mrf.mxu0
        %v747 = vadd.f32 %v572, %v746
        %v748 = vpop.f32.mrf.mxu0
        %749 = vmatprep.mubr.bf16.mxu0 0
        %750 = vmatmul.mubr.bf16.gmra.mxu0 %v547
        %v751 = vpop.f32.mrf.mxu0
        %v752 = vadd.f32 %v572, %v751
        %v753 = vpop.f32.mrf.mxu0
        %v754 = vpop.f32.mrf.mxu0
        %v755 = vadd.f32 %v572, %v754
        %v756 = vpop.f32.mrf.mxu0
        %757 = vmatprep.mubr.bf16.mxu0 0
        %758 = vmatmul.mubr.bf16.gmra.mxu0 %v548
        %v759 = vpop.f32.mrf.mxu0
        %v760 = vadd.f32 %v572, %v759
        %v761 = vpop.f32.mrf.mxu0
        %v762 = vpop.f32.mrf.mxu0
        %v763 = vadd.f32 %v572, %v762
        %v764 = vpop.f32.mrf.mxu0
        %765 = vmatprep.mubr.bf16.mxu0 0
        %766 = vmatmul.mubr.bf16.gmra.mxu0 %v549
        %v767 = vpop.f32.mrf.mxu0
        %v768 = vadd.f32 %v572, %v767
        %v769 = vpop.f32.mrf.mxu0
        %v770 = vpop.f32.mrf.mxu0
        %v771 = vadd.f32 %v572, %v770
        %v772 = vpop.f32.mrf.mxu0
        %773 = vmatprep.mubr.bf16.mxu0 0
        %774 = vmatmul.mubr.bf16.gmra.mxu0 %v550
        %v775 = vpop.f32.mrf.mxu0
        %v776 = vadd.f32 %v572, %v775
        %v777 = vpop.f32.mrf.mxu0
        %v778 = vpop.f32.mrf.mxu0
        %v779 = vadd.f32 %v572, %v778
        %v780 = vpop.f32.mrf.mxu0
        %781 = vdwg.mxu0
        %v782 = vmax.f32 %v656, 0.0
        %v783 = vmax.f32 %v659, 0.0
        %v784 = vmax.f32 %v664, 0.0
        %v785 = vmax.f32 %v667, 0.0
        %v786 = vmax.f32 %v672, 0.0
        %v787 = vmax.f32 %v675, 0.0
        %v788 = vmax.f32 %v680, 0.0
        %v789 = vmax.f32 %v683, 0.0
        %v790 = vmax.f32 %v688, 0.0
        %v791 = vmax.f32 %v691, 0.0
        %v792 = vmax.f32 %v696, 0.0
        %v793 = vmax.f32 %v699, 0.0
        %v794 = vmax.f32 %v704, 0.0
        %v795 = vmax.f32 %v707, 0.0
        %v796 = vmax.f32 %v712, 0.0
        %v797 = vmax.f32 %v715, 0.0
        %v798 = vmax.f32 %v720, 0.0
        %v799 = vmax.f32 %v723, 0.0
        %v800 = vmax.f32 %v728, 0.0
        %v801 = vmax.f32 %v731, 0.0
        %v802 = vmax.f32 %v736, 0.0
        %v803 = vmax.f32 %v739, 0.0
        %v804 = vmax.f32 %v744, 0.0
        %v805 = vmax.f32 %v747, 0.0
        %v806 = vmax.f32 %v752, 0.0
        %v807 = vmax.f32 %v755, 0.0
        %v808 = vmax.f32 %v760, 0.0
        %v809 = vmax.f32 %v763, 0.0
        %v810 = vmax.f32 %v768, 0.0
        %v811 = vmax.f32 %v771, 0.0
        %v812 = vmax.f32 %v776, 0.0
        %v813 = vmax.f32 %v779, 0.0
        %v814 = vadd.f32 %v782, %v225
        %v815 = vadd.f32 %v783, %v226
        %v816 = vadd.f32 %v784, %v227
        %v817 = vadd.f32 %v785, %v228
        %v818 = vadd.f32 %v786, %v229
        %v819 = vadd.f32 %v787, %v230
        %v820 = vadd.f32 %v788, %v231
        %v821 = vadd.f32 %v789, %v232
        %v822 = vadd.f32 %v790, %v233
        %v823 = vadd.f32 %v791, %v234
        %v824 = vadd.f32 %v792, %v235
        %v825 = vadd.f32 %v793, %v236
        %v826 = vadd.f32 %v794, %v237
        %v827 = vadd.f32 %v795, %v238
        %v828 = vadd.f32 %v796, %v239
        %v829 = vadd.f32 %v797, %v240
        %v830 = vadd.f32 %v798, %v241
        %v831 = vadd.f32 %v799, %v242
        %v832 = vadd.f32 %v800, %v243
        %v833 = vadd.f32 %v801, %v244
        %v834 = vadd.f32 %v802, %v245
        %v835 = vadd.f32 %v803, %v246
        %v836 = vadd.f32 %v804, %v247
        %v837 = vadd.f32 %v805, %v248
        %v838 = vadd.f32 %v806, %v249
        %v839 = vadd.f32 %v807, %v250
        %v840 = vadd.f32 %v808, %v251
        %v841 = vadd.f32 %v809, %v252
        %v842 = vadd.f32 %v810, %v253
        %v843 = vadd.f32 %v811, %v254
        %v844 = vadd.f32 %v812, %v255
        %v845 = vadd.f32 %v813, %v256
        %846 = vxpose.xlu0.b32.start [1/16] %v814, 128
        %847 = vxpose.xlu0.b32.cont [2/16] %v815, 128
        %848 = vxpose.xlu0.b32.cont [3/16] %v816, 128
        %849 = vxpose.xlu0.b32.cont [4/16] %v817, 128
        %850 = vxpose.xlu0.b32.cont [5/16] %v818, 128
        %851 = vxpose.xlu0.b32.cont [6/16] %v819, 128
        %852 = vxpose.xlu0.b32.cont [7/16] %v820, 128
        %853 = vxpose.xlu0.b32.cont [8/16] %v821, 128
        %854 = vxpose.xlu0.b32.cont [9/16] %v822, 128
        %855 = vxpose.xlu0.b32.cont [10/16] %v823, 128
        %856 = vxpose.xlu0.b32.cont [11/16] %v824, 128
        %857 = vxpose.xlu0.b32.cont [12/16] %v825, 128
        %858 = vxpose.xlu0.b32.cont [13/16] %v826, 128
        %859 = vxpose.xlu0.b32.cont [14/16] %v827, 128
        %860 = vxpose.xlu0.b32.cont [15/16] %v828, 128
        %861 = vxpose.xlu0.b32.end [16/16] %v829, 128
        %v862 = vpop.trf.xlu0
        %v863 = vpop.trf.xlu0
        %v864 = vpop.trf.xlu0
        %v865 = vpop.trf.xlu0
        %v866 = vpop.trf.xlu0
        %v867 = vpop.trf.xlu0
        %v868 = vpop.trf.xlu0
        %v869 = vpop.trf.xlu0
        %v870 = vpop.trf.xlu0
        %v871 = vpop.trf.xlu0
        %v872 = vpop.trf.xlu0
        %v873 = vpop.trf.xlu0
        %v874 = vpop.trf.xlu0
        %v875 = vpop.trf.xlu0
        %v876 = vpop.trf.xlu0
        %v877 = vpop.trf.xlu0
        %878 = vxpose.xlu0.b32.start [1/16] %v830, 128
        %879 = vxpose.xlu0.b32.cont [2/16] %v831, 128
        %880 = vxpose.xlu0.b32.cont [3/16] %v832, 128
        %881 = vxpose.xlu0.b32.cont [4/16] %v833, 128
        %882 = vxpose.xlu0.b32.cont [5/16] %v834, 128
        %883 = vxpose.xlu0.b32.cont [6/16] %v835, 128
        %884 = vxpose.xlu0.b32.cont [7/16] %v836, 128
        %885 = vxpose.xlu0.b32.cont [8/16] %v837, 128
        %886 = vxpose.xlu0.b32.cont [9/16] %v838, 128
        %887 = vxpose.xlu0.b32.cont [10/16] %v839, 128
        %888 = vxpose.xlu0.b32.cont [11/16] %v840, 128
        %889 = vxpose.xlu0.b32.cont [12/16] %v841, 128
        %890 = vxpose.xlu0.b32.cont [13/16] %v842, 128
        %891 = vxpose.xlu0.b32.cont [14/16] %v843, 128
        %892 = vxpose.xlu0.b32.cont [15/16] %v844, 128
        %893 = vxpose.xlu0.b32.end [16/16] %v845, 128
        %v894 = vpop.trf.xlu0
        %v895 = vpop.trf.xlu0
        %v896 = vpop.trf.xlu0
        %v897 = vpop.trf.xlu0
        %v898 = vpop.trf.xlu0
        %v899 = vpop.trf.xlu0
        %v900 = vpop.trf.xlu0
        %v901 = vpop.trf.xlu0
        %v902 = vpop.trf.xlu0
        %v903 = vpop.trf.xlu0
        %v904 = vpop.trf.xlu0
        %v905 = vpop.trf.xlu0
        %v906 = vpop.trf.xlu0
        %v907 = vpop.trf.xlu0
        %v908 = vpop.trf.xlu0
        %v909 = vpop.trf.xlu0
        %910 = vst [vmem:[%s221] sm:$0xff] %v862
        %911 = vst [vmem:[%s221 + $0x8] sm:$0xff] %v894
        %912 = vst [vmem:[%s221 + $0x10] sm:$0xff] %v863
        %913 = vst [vmem:[%s221 + $0x18] sm:$0xff] %v895
        %914 = vst [vmem:[%s221 + $0x20] sm:$0xff] %v864
        %915 = vst [vmem:[%s221 + $0x28] sm:$0xff] %v896
        %916 = vst [vmem:[%s221 + $0x30] sm:$0xff] %v865
        %917 = vst [vmem:[%s221 + $0x38] sm:$0xff] %v897
        %918 = vst [vmem:[%s221 + $0x40] sm:$0xff] %v866
        %919 = vst [vmem:[%s221 + $0x48] sm:$0xff] %v898
        %920 = vst [vmem:[%s221 + $0x50] sm:$0xff] %v867
        %921 = vst [vmem:[%s221 + $0x58] sm:$0xff] %v899
        %922 = vst [vmem:[%s221 + $0x60] sm:$0xff] %v868
        %923 = vst [vmem:[%s221 + $0x68] sm:$0xff] %v900
        %924 = vst [vmem:[%s221 + $0x70] sm:$0xff] %v869
        %925 = vst [vmem:[%s221 + $0x78] sm:$0xff] %v901
        %926 = vst [vmem:[%s221 + $0x80] sm:$0xff] %v870
        %927 = vst [vmem:[%s221 + $0x88] sm:$0xff] %v902
        %928 = vst [vmem:[%s221 + $0x90] sm:$0xff] %v871
        %929 = vst [vmem:[%s221 + $0x98] sm:$0xff] %v903
        %930 = vst [vmem:[%s221 + $0xa0] sm:$0xff] %v872
        %931 = vst [vmem:[%s221 + $0xa8] sm:$0xff] %v904
        %932 = vst [vmem:[%s221 + $0xb0] sm:$0xff] %v873
        %933 = vst [vmem:[%s221 + $0xb8] sm:$0xff] %v905
        %934 = vst [vmem:[%s221 + $0xc0] sm:$0xff] %v874
        %935 = vst [vmem:[%s221 + $0xc8] sm:$0xff] %v906
        %936 = vst [vmem:[%s221 + $0xd0] sm:$0xff] %v875
        %937 = vst [vmem:[%s221 + $0xd8] sm:$0xff] %v907
        %938 = vst [vmem:[%s221 + $0xe0] sm:$0xff] %v876
        %939 = vst [vmem:[%s221 + $0xe8] sm:$0xff] %v908
        %940 = vst [vmem:[%s221 + $0xf0] sm:$0xff] %v877
        %941 = vst [vmem:[%s221 + $0xf8] sm:$0xff] %v909
        %s942 = sand.u32 %s113, 1
        %s943 = scalar_lea.sflag [#allocation4], %s942
        %s944 = sand.u32 %s113, 1
        %s945 = smul.addr %s944, 256
        %s946 = scalar_lea.vmem [#allocation7], %s945
        // Predicated region
        $region41: #{tpu_custom_call.1} parent=31 // pred_check
          %p947 = pneg %p123
        $region42: #{tpu_custom_call.1} parent=31 // pred_check_branch
          %949 = sbr.rel (%p947) target = $region44
        $region43: #{tpu_custom_call.1} parent=31 // pred_region
          %s950 = smul.u32 2, %s26
          %s952 = ssub.s32 4096, 4096
          %953 = vsyncadd %s943, %s952
          %s954 = smul.addr %s25, 64
          %s955 = sadd.s32 %s950, %s954
          %s956 = smul.addr %s955, 128
          %s957 = scalar_lea.hbm %s3, %s956
          %s958 = sshll.u32 %s946, 4
          %s959 = int_to_ptr.vmem [resolvable:$true] %s958
          %964 = dma.vmem_to_hbm [thread:$0]  %s959, 4096, %s957, %s943, 256, 512, 16
        $region44: #{tpu_custom_call.1} parent=31 // pred_fallthru
          _
      $region32: #{tpu_custom_call.1} parent=5 // pred_fallthru
        _
      %p965 = scmp.le.s32.totalorder 2, %s16
      // Predicated region
      $region45: #{tpu_custom_call.1} parent=5 // pred_check
        %p966 = pneg %p965
      $region46: #{tpu_custom_call.1} parent=5 // pred_check_branch
        %968 = sbr.rel (%p966) target = $region48
      $region47: #{tpu_custom_call.1} parent=5 // pred_region
        %s969 = ssub.s32 %s16, 2
        // Predicated region
        $region49: #{tpu_custom_call.1} parent=47 // pred_check
          %p970 = pneg %p129
        $region50: #{tpu_custom_call.1} parent=47 // pred_check_branch
          %972 = sbr.rel (%p970) target = $region52
        $region51: #{tpu_custom_call.1} parent=47 // pred_region
          %s973 = sand.u32 %s114, 1
          %s974 = scalar_lea.sflag [#allocation4], %s973
          %s975 = sand.u32 %s114, 1
          %s976 = smul.addr %s975, 256
          %s977 = scalar_lea.vmem [#allocation7], %s976
          %978 = dma.done %s974, 4096
        $region52: #{tpu_custom_call.1} parent=47 // pred_fallthru
          _
      $region48: #{tpu_custom_call.1} parent=5 // pred_fallthru
        _
    $region6: #{tpu_custom_call.1} parent=1 // loop_footer
      %s20 = sadd.s32 1, %s16
    $region7: #{tpu_custom_call.1} parent=1 // loop_footer_branch
      %15 = sbr.rel target = $region3
    $region8: #{tpu_custom_call.1} parent=1 // loop_exit
      _
    %979 = vsyncpa [#allocation3], 1
    %s980 = scalar_lea.sflag [#allocation3], 1
    %981 = vsyncpa %s980, 1
    %982 = vsyncpa [#allocation6], 1
    %983 = vsyncpa [#allocation4], 1
    %s984 = scalar_lea.sflag [#allocation4], 1
    %985 = vsyncpa %s984, 1

</llo_original>
